<compile_context>
chip_gen: v7x
topology: tpu7x:2x2x1
jax: 0.10.0
libtpu: 0.0.40
codegen_flags: <defaults>
</compile_context>

<pallas_src>
import functools

import jax
import jax.numpy as jnp
from jax.experimental import pallas as pl
from jax.experimental.pallas import tpu as pltpu


def _round_up(x, m):
    return ((x + m - 1) // m) * m


def vae_kernel(x_ref, eps_ref,
               w1_ref, b1_ref,
               wh_ref, bh_ref,
               wd_ref, bd_ref,
               wout_ref, bout_ref,
               recon_ref, packed_ref,
               acc_ref, hd_ref,
               *, latent_dim):
    L = latent_dim
    bf16 = jnp.bfloat16
    f32 = jnp.float32

    p = pl.program_id(1)          # phase: 0 = encoder K-stream, 1 = decoder N-stream
    d = pl.program_id(2)          # feature-tile index
    nd = pl.num_programs(2)

    # ---------- phase 0: stream x / w1 K-tiles, accumulate encoder hidden in f32 ----------
    @pl.when(p == 0)
    def _encode_accumulate():
        @pl.when(d == 0)
        def _():
            acc_ref[...] = jnp.zeros_like(acc_ref)
        acc_ref[...] += jnp.dot(x_ref[...].astype(bf16), w1_ref[...],
                                preferred_element_type=f32)

    # ---------- end of phase 0: bias+relu, fused mu|logvar head, reparam, decoder hidden ----------
    @pl.when(jnp.logical_and(p == 0, d == nd - 1))
    def _bottleneck():
        h = jnp.maximum(acc_ref[...] + b1_ref[...], 0.0).astype(bf16)
        # TODO(synk): nn.Dropout(0.1) is identity in eval mode; training-mode masks omitted.

        # fused [mu | logvar | 0-pad] head: wh/bh are zero-padded to a full 128-lane width,
        # so this matmul and the packed store below are lane-dense / unmasked.
        heads = jnp.dot(h, wh_ref[...], preferred_element_type=f32) + bh_ref[...]
        mu = heads[:, :L]
        logvar = heads[:, L:2 * L]

        # reparameterization: z = mu + eps * exp(0.5 * logvar)   (f32)
        z = mu + eps_ref[...] * jnp.exp(0.5 * logvar)

        # packed slab: [mu | logvar | z | zeros]  (lanes 2L: of `heads` are already zero)
        packed_ref[...] = heads
        packed_ref[:, 2 * L:3 * L] = z

        # decoder hidden + relu, kept resident as bf16 for the phase-1 N-stream
        hd = jnp.dot(z.astype(bf16), wd_ref[...], preferred_element_type=f32) + bd_ref[...]
        hd_ref[...] = jnp.maximum(hd, 0.0).astype(bf16)

    # ---------- phase 1: stream wout N-tiles, write recon tiles ----------
    @pl.when(p == 1)
    def _decode():
        recon_ref[...] = (jnp.dot(hd_ref[...], wout_ref[...],
                                  preferred_element_type=f32)
                          + bout_ref[...]).astype(recon_ref.dtype)


def _pick_batch_tile(B, num_cores=2):
    """Largest tb >= 128 that divides B and leaves >= 2 steps per TensorCore;
    otherwise run the whole batch as a single tile (never emit tiny M tiles)."""
    for tb in (1024, 512, 256, 128):
        if B % tb == 0 and (B // tb) >= 2 * num_cores:
            return tb
    return B


def _vmem_limit_bytes(tb, td, H, L, PACK):
    f4, b2 = 4, 2
    streamed = (tb * td * f4        # x tile
                + td * H * b2       # w1 K-tile
                + H * td * b2       # wout N-tile
                + td * f4           # bout tile
                + tb * td * f4      # recon tile
                + tb * PACK * f4    # packed tile
                + tb * L * f4)      # eps tile
    resident = (H * f4 + H * PACK * b2 + PACK * f4 + L * H * b2 + H * f4)
    scratch = tb * H * f4 + tb * H * b2
    need = 2 * (streamed + resident) + scratch      # double-buffered windows
    return int(min(max(2 * need, 32 << 20), 64 << 20))


def vae_forward(x, eps, params, *, batch_tile=None, d_tile=None):
    """Fused VAE forward. x: (B, D) f32, eps: (B, L) f32.
    Returns (recon, mu, logvar, z)."""
    B, D = x.shape
    L = eps.shape[1]
    H = params["w1"].shape[1]
    PACK = params["wheads"].shape[1]            # padded head / packed slab width (mult of 128)
    assert PACK % 128 == 0 and PACK >= 3 * L

    # ---- batch tiling ----
    tb = batch_tile if batch_tile is not None else _pick_batch_tile(B)
    assert B % tb == 0 and (tb == B or tb % 8 == 0)
    nb = B // tb

    # ---- feature (D) tiling: stream w1 K-tiles / wout N-tiles ----
    if d_tile is None:
        td = 512 if D > 1024 else _round_up(D, 128)
    else:
        td = _round_up(d_tile, 128)
    D_pad = _round_up(D, td)
    nd = D_pad // td
    last = nd - 1

    # zero-pad feature dim -> identical math, lane-dense tiles
    if D_pad != D:
        x_p = jnp.pad(x, ((0, 0), (0, D_pad - D)))
        w1_p = jnp.pad(params["w1"], ((0, D_pad - D), (0, 0)))
        wout_p = jnp.pad(params["wout"], ((0, 0), (0, D_pad - D)))
        bout_p = jnp.pad(params["bout"], ((0, 0), (0, D_pad - D)))
    else:
        x_p, w1_p, wout_p, bout_p = x, params["w1"], params["wout"], params["bout"]

    grid = (nb, 2, nd)

    in_specs = [
        # x: (tb, td) K-tiles during phase 0; pinned to its last tile in phase 1 (no refetch)
        pl.BlockSpec((tb, td), lambda i, p, d: (i, d * (1 - p) + last * p)),
        # eps: one (tb, L) tile per batch step
        pl.BlockSpec((tb, L), lambda i, p, d: (i, 0)),
        # w1: (td, H) K-tiles during phase 0; pinned during phase 1
        pl.BlockSpec((td, H), lambda i, p, d: (d * (1 - p) + last * p, 0)),
        # small invariant weights: constant block -> fetched once, stay resident
        pl.BlockSpec((1, H), lambda i, p, d: (0, 0)),          # b1
        pl.BlockSpec((H, PACK), lambda i, p, d: (0, 0)),       # wheads (padded to 128 lanes)
        pl.BlockSpec((1, PACK), lambda i, p, d: (0, 0)),       # bheads (padded)
        pl.BlockSpec((L, H), lambda i, p, d: (0, 0)),          # wd
        pl.BlockSpec((1, H), lambda i, p, d: (0, 0)),          # bd
        # wout / bout: (H, td) / (1, td) N-tiles during phase 1 (tile 0 prefetched in phase 0)
        pl.BlockSpec((H, td), lambda i, p, d: (0, d * p)),
        pl.BlockSpec((1, td), lambda i, p, d: (0, d * p)),
    ]
    out_specs = [
        # recon: (tb, td) tiles, written during phase 1
        pl.BlockSpec((tb, td), lambda i, p, d: (i, d * p)),
        # packed [mu | logvar | z | pad]: one lane-dense (tb, PACK) tile per batch step
        pl.BlockSpec((tb, PACK), lambda i, p, d: (i, 0)),
    ]
    out_shape = [
        jax.ShapeDtypeStruct((B, D_pad), jnp.float32),
        jax.ShapeDtypeStruct((B, PACK), jnp.float32),
    ]
    scratch_shapes = [
        pltpu.VMEM((tb, H), jnp.float32),     # encoder accumulator
        pltpu.VMEM((tb, H), jnp.bfloat16),    # decoder hidden (resident across phase 1)
    ]

    flops = 2 * B * (D_pad * H + H * PACK + L * H + H * D_pad)
    transcendentals = B * L
    streamed_weight_bytes = nb * (2 * D_pad * H + 2 * H * D_pad + 4 * D_pad)
    resident_weight_bytes = 2 * (H * PACK + L * H) + 4 * (2 * H + PACK)
    act_bytes = 4 * B * (D_pad + L) + 4 * B * (D_pad + PACK)
    cost = pl.CostEstimate(flops=flops,
                           transcendentals=transcendentals,
                           bytes_accessed=streamed_weight_bytes
                           + resident_weight_bytes + act_bytes)

    kernel = functools.partial(vae_kernel, latent_dim=L)

    fn = pl.pallas_call(
        kernel,
        out_shape=out_shape,
        grid_spec=pltpu.PrefetchScalarGridSpec(
            num_scalar_prefetch=0,
            grid=grid,
            in_specs=in_specs,
            out_specs=out_specs,
            scratch_shapes=scratch_shapes,
        ),
        compiler_params=pltpu.CompilerParams(
            dimension_semantics=("parallel", "arbitrary", "arbitrary"),
            vmem_limit_bytes=_vmem_limit_bytes(tb, td, H, L, PACK),
        ),
        cost_estimate=cost,
    )
    recon_pad, packed = fn(
        x_p, eps,
        w1_p, params["b1"],
        params["wheads"], params["bheads"],
        params["wd"], params["bd"],
        wout_p, bout_p,
    )
    recon = recon_pad[:, :D]
    mu = packed[:, :L]
    logvar = packed[:, L:2 * L]
    z = packed[:, 2 * L:3 * L]
    return recon, mu, logvar, z


def init_params(key, input_dim, hidden_dim=512, latent_dim=32):
    """nn.Linear-style init U(-1/sqrt(fan_in), 1/sqrt(fan_in)); weights stored bf16,
    mu/logvar heads fused and zero-padded to a 128-lane-multiple width."""
    def linear(k, fan_in, fan_out):
        kw, kb = jax.random.split(k)
        bound = 1.0 / jnp.sqrt(float(fan_in))
        w = jax.random.uniform(kw, (fan_in, fan_out), jnp.float32, -bound, bound)
        b = jax.random.uniform(kb, (1, fan_out), jnp.float32, -bound, bound)
        return w, b

    keys = jax.random.split(key, 5)
    w1, b1 = linear(keys[0], input_dim, hidden_dim)
    wmu, bmu = linear(keys[1], hidden_dim, latent_dim)
    wlv, blv = linear(keys[2], hidden_dim, latent_dim)
    wd, bd = linear(keys[3], latent_dim, hidden_dim)
    wout, bout = linear(keys[4], hidden_dim, input_dim)

    L = latent_dim
    pack = _round_up(3 * L, 128)
    wheads = jnp.zeros((hidden_dim, pack), jnp.float32)
    wheads = wheads.at[:, :L].set(wmu).at[:, L:2 * L].set(wlv)
    bheads = jnp.zeros((1, pack), jnp.float32)
    bheads = bheads.at[:, :L].set(bmu).at[:, L:2 * L].set(blv)

    bf16 = jnp.bfloat16
    return dict(
        w1=w1.astype(bf16), b1=b1,
        wheads=wheads.astype(bf16), bheads=bheads,
        wd=wd.astype(bf16), bd=bd,
        wout=wout.astype(bf16), bout=bout,
    )


if __name__ == "__main__":
    key = jax.random.PRNGKey(0)
    k_params, k_x, k_eps = jax.random.split(key, 3)

    # small demo shapes; module defaults hidden=512, latent=32.
    # D=200 with d_tile=128 exercises both the feature-dim zero-padding (200 -> 256)
    # and the multi-tile K/N streaming path (nd = 2).
    B, D, H, L = 16, 200, 512, 32
    params = init_params(k_params, input_dim=D, hidden_dim=H, latent_dim=L)
    x = jax.random.normal(k_x, (B, D), jnp.float32)
    # TODO(synk): eps is passed in (instead of in-kernel pltpu.prng) so the reference check is exact.
    eps = jax.random.normal(k_eps, (B, L), jnp.float32)

    recon, mu, logvar, z = vae_forward(x, eps, params, d_tile=128)
    jax.block_until_ready((recon, mu, logvar, z))

    # plain-JAX reference mirroring the bf16-matmul / f32-accumulate math
    bf16, f32 = jnp.bfloat16, jnp.float32
    h = jnp.maximum(
        jnp.dot(x.astype(bf16), params["w1"], preferred_element_type=f32) + params["b1"], 0.0)
    heads = jnp.dot(h.astype(bf16), params["wheads"], preferred_element_type=f32) + params["bheads"]
    mu_r, lv_r = heads[:, :L], heads[:, L:2 * L]
    z_r = mu_r + eps * jnp.exp(0.5 * lv_r)
    hd = jnp.maximum(
        jnp.dot(z_r.astype(bf16), params["wd"], preferred_element_type=f32) + params["bd"], 0.0)
    recon_r = jnp.dot(hd.astype(bf16), params["wout"], preferred_element_type=f32) + params["bout"]

    assert jnp.allclose(mu, mu_r, atol=2e-2, rtol=2e-2)
    assert jnp.allclose(logvar, lv_r, atol=2e-2, rtol=2e-2)
    assert jnp.allclose(z, z_r, atol=2e-2, rtol=2e-2)
    assert jnp.allclose(recon, recon_r, atol=2e-2, rtol=2e-2)

    print("KERNEL_OK")
</pallas_src>

<mosaic_0001>
module attributes {stable_mosaic.version = 11 : i64} {
  func.func @vae_kernel(%arg0: i32, %arg1: i32, %arg2: i32, %arg3: memref<16x128xf32, #tpu.memory_space<vmem>>, %arg4: memref<16x32xf32, #tpu.memory_space<vmem>>, %arg5: memref<128x512xbf16, #tpu.memory_space<vmem>>, %arg6: memref<1x512xf32, #tpu.memory_space<vmem>>, %arg7: memref<512x128xbf16, #tpu.memory_space<vmem>>, %arg8: memref<1x128xf32, #tpu.memory_space<vmem>>, %arg9: memref<32x512xbf16, #tpu.memory_space<vmem>>, %arg10: memref<1x512xf32, #tpu.memory_space<vmem>>, %arg11: memref<512x128xbf16, #tpu.memory_space<vmem>>, %arg12: memref<1x128xf32, #tpu.memory_space<vmem>>, %arg13: memref<16x128xf32, #tpu.memory_space<vmem>>, %arg14: memref<16x128xf32, #tpu.memory_space<vmem>>, %arg15: memref<16x512xf32, #tpu.memory_space<vmem>>, %arg16: memref<16x512xbf16, #tpu.memory_space<vmem>>) attributes {dimension_semantics = [#tpu.dimension_semantics<parallel>, #tpu.dimension_semantics<arbitrary>, #tpu.dimension_semantics<arbitrary>], iteration_bounds = array<i64: 1, 2, 2>, scalar_prefetch = 0 : i64, scratch_operands = 2 : i64, tpu.core_type = #tpu.core_type<tc>, window_params = [{transform_indices = @transform_0, window_bounds = array<i64: 16, 128>}, {transform_indices = @transform_1, window_bounds = array<i64: 16, 32>}, {transform_indices = @transform_2, window_bounds = array<i64: 128, 512>}, {pipeline_mode = #tpu.pipeline_mode<synchronous>, transform_indices = @transform_3, window_bounds = array<i64: 1, 512>}, {pipeline_mode = #tpu.pipeline_mode<synchronous>, transform_indices = @transform_4, window_bounds = array<i64: 512, 128>}, {pipeline_mode = #tpu.pipeline_mode<synchronous>, transform_indices = @transform_5, window_bounds = array<i64: 1, 128>}, {pipeline_mode = #tpu.pipeline_mode<synchronous>, transform_indices = @transform_6, window_bounds = array<i64: 32, 512>}, {pipeline_mode = #tpu.pipeline_mode<synchronous>, transform_indices = @transform_7, window_bounds = array<i64: 1, 512>}, {transform_indices = @transform_8, window_bounds = array<i64: 512, 128>}, {transform_indices = @transform_9, window_bounds = array<i64: 1, 128>}, {transform_indices = @transform_10, window_bounds = array<i64: 16, 128>}, {transform_indices = @transform_11, window_bounds = array<i64: 16, 128>}]} {
    %c0_i32 = arith.constant 0 : i32
    %0 = arith.cmpi eq, %arg1, %c0_i32 : i32
    %1 = arith.extui %0 : i1 to i32
    %c0_i32_0 = arith.constant 0 : i32
    %2 = arith.cmpi ne, %1, %c0_i32_0 : i32
    scf.if %2 {
      %c0_i32_5 = arith.constant 0 : i32
      %11 = arith.cmpi eq, %arg2, %c0_i32_5 : i32
      %12 = arith.extui %11 : i1 to i32
      %c0_i32_6 = arith.constant 0 : i32
      %13 = arith.cmpi ne, %12, %c0_i32_6 : i32
      scf.if %13 {
        %cst_14 = arith.constant 0.000000e+00 : f32
        %21 = vector.broadcast %cst_14 : f32 to vector<16x512xf32>
        %c0_15 = arith.constant 0 : index
        %c0_16 = arith.constant 0 : index
        %22 = vector.load %arg15[%c0_15, %c0_16] : memref<16x512xf32, #tpu.memory_space<vmem>>, vector<16x512xf32>
        tpu.vector_store %arg15[%c0_15, %c0_16], %21 {strides = array<i32>} : memref<16x512xf32, #tpu.memory_space<vmem>>, vector<16x512xf32>,
      } else {
      }
      %c0 = arith.constant 0 : index
      %c0_7 = arith.constant 0 : index
      %14 = vector.load %arg15[%c0, %c0_7] : memref<16x512xf32, #tpu.memory_space<vmem>>, vector<16x512xf32>
      %c0_8 = arith.constant 0 : index
      %c0_9 = arith.constant 0 : index
      %15 = vector.load %arg3[%c0_8, %c0_9] : memref<16x128xf32, #tpu.memory_space<vmem>>, vector<16x128xf32>
      %16 = arith.truncf %15 : vector<16x128xf32> to vector<16x128xbf16>
      %c0_10 = arith.constant 0 : index
      %c0_11 = arith.constant 0 : index
      %17 = vector.load %arg5[%c0_10, %c0_11] : memref<128x512xbf16, #tpu.memory_space<vmem>>, vector<128x512xbf16>
      %cst = arith.constant dense<0.000000e+00> : vector<16x512xf32>
      %18 = tpu.matmul %16, %17, %cst {dimension_numbers = #tpu.dot_dimension_numbers<[1], [0], [0], [1], [0, 0, 1, 1], [], []>} : vector<16x128xbf16>, vector<128x512xbf16>, vector<16x512xf32> -> vector<16x512xf32>
      %19 = arith.addf %14, %18 : vector<16x512xf32>
      %c0_12 = arith.constant 0 : index
      %c0_13 = arith.constant 0 : index
      %20 = vector.load %arg15[%c0_12, %c0_13] : memref<16x512xf32, #tpu.memory_space<vmem>>, vector<16x512xf32>
      tpu.vector_store %arg15[%c0_12, %c0_13], %19 {strides = array<i32>} : memref<16x512xf32, #tpu.memory_space<vmem>>, vector<16x512xf32>,
    } else {
    }
    %c0_i32_1 = arith.constant 0 : i32
    %3 = arith.cmpi eq, %arg1, %c0_i32_1 : i32
    %c1_i32 = arith.constant 1 : i32
    %4 = arith.cmpi eq, %arg2, %c1_i32 : i32
    %5 = arith.andi %3, %4 : i1
    %6 = arith.extui %5 : i1 to i32
    %c0_i32_2 = arith.constant 0 : i32
    %7 = arith.cmpi ne, %6, %c0_i32_2 : i32
    scf.if %7 {
      %c0 = arith.constant 0 : index
      %c0_5 = arith.constant 0 : index
      %11 = vector.load %arg15[%c0, %c0_5] : memref<16x512xf32, #tpu.memory_space<vmem>>, vector<16x512xf32>
      %c0_6 = arith.constant 0 : index
      %c0_7 = arith.constant 0 : index
      %12 = vector.load %arg6[%c0_6, %c0_7] : memref<1x512xf32, #tpu.memory_space<vmem>>, vector<1x512xf32>
      %13 = vector.broadcast %12 : vector<1x512xf32> to vector<16x512xf32>
      %14 = arith.addf %11, %13 : vector<16x512xf32>
      %cst = arith.constant 0.000000e+00 : f32
      %15 = vector.broadcast %cst : f32 to vector<16x512xf32>
      %16 = arith.maximumf %14, %15 : vector<16x512xf32>
      %17 = arith.truncf %16 : vector<16x512xf32> to vector<16x512xbf16>
      %c0_8 = arith.constant 0 : index
      %c0_9 = arith.constant 0 : index
      %18 = vector.load %arg7[%c0_8, %c0_9] : memref<512x128xbf16, #tpu.memory_space<vmem>>, vector<512x128xbf16>
      %cst_10 = arith.constant dense<0.000000e+00> : vector<16x128xf32>
      %19 = tpu.matmul %17, %18, %cst_10 {dimension_numbers = #tpu.dot_dimension_numbers<[1], [0], [0], [1], [0, 0, 1, 1], [], []>} : vector<16x512xbf16>, vector<512x128xbf16>, vector<16x128xf32> -> vector<16x128xf32>
      %c0_11 = arith.constant 0 : index
      %c0_12 = arith.constant 0 : index
      %20 = vector.load %arg8[%c0_11, %c0_12] : memref<1x128xf32, #tpu.memory_space<vmem>>, vector<1x128xf32>
      %21 = vector.broadcast %20 : vector<1x128xf32> to vector<16x128xf32>
      %22 = arith.addf %19, %21 : vector<16x128xf32>
      %23 = vector.extract_strided_slice %22 {offsets = [0, 0], sizes = [16, 32], strides = [1, 1]} : vector<16x128xf32> to vector<16x32xf32>
      %24 = vector.extract_strided_slice %22 {offsets = [0, 32], sizes = [16, 32], strides = [1, 1]} : vector<16x128xf32> to vector<16x32xf32>
      %c0_13 = arith.constant 0 : index
      %c0_14 = arith.constant 0 : index
      %25 = vector.load %arg4[%c0_13, %c0_14] : memref<16x32xf32, #tpu.memory_space<vmem>>, vector<16x32xf32>
      %cst_15 = arith.constant 5.000000e-01 : f32
      %26 = vector.broadcast %cst_15 : f32 to vector<16x32xf32>
      %27 = arith.mulf %26, %24 : vector<16x32xf32>
      %28 = math.exp %27 : vector<16x32xf32>
      %29 = arith.mulf %25, %28 : vector<16x32xf32>
      %30 = arith.addf %23, %29 : vector<16x32xf32>
      %c0_16 = arith.constant 0 : index
      %c0_17 = arith.constant 0 : index
      %31 = vector.load %arg14[%c0_16, %c0_17] : memref<16x128xf32, #tpu.memory_space<vmem>>, vector<16x128xf32>
      tpu.vector_store %arg14[%c0_16, %c0_17], %22 {strides = array<i32>} : memref<16x128xf32, #tpu.memory_space<vmem>>, vector<16x128xf32>,
      %c0_18 = arith.constant 0 : index
      %c64 = arith.constant 64 : index
      %32 = vector.load %arg14[%c0_18, %c64] : memref<16x128xf32, #tpu.memory_space<vmem>>, vector<16x32xf32>
      tpu.vector_store %arg14[%c0_18, %c64], %30 {strides = array<i32>} : memref<16x128xf32, #tpu.memory_space<vmem>>, vector<16x32xf32>,
      %33 = arith.truncf %30 : vector<16x32xf32> to vector<16x32xbf16>
      %c0_19 = arith.constant 0 : index
      %c0_20 = arith.constant 0 : index
      %34 = vector.load %arg9[%c0_19, %c0_20] : memref<32x512xbf16, #tpu.memory_space<vmem>>, vector<32x512xbf16>
      %cst_21 = arith.constant dense<0.000000e+00> : vector<16x512xf32>
      %35 = tpu.matmul %33, %34, %cst_21 {dimension_numbers = #tpu.dot_dimension_numbers<[1], [0], [0], [1], [0, 0, 1, 1], [], []>} : vector<16x32xbf16>, vector<32x512xbf16>, vector<16x512xf32> -> vector<16x512xf32>
      %c0_22 = arith.constant 0 : index
      %c0_23 = arith.constant 0 : index
      %36 = vector.load %arg10[%c0_22, %c0_23] : memref<1x512xf32, #tpu.memory_space<vmem>>, vector<1x512xf32>
      %37 = vector.broadcast %36 : vector<1x512xf32> to vector<16x512xf32>
      %38 = arith.addf %35, %37 : vector<16x512xf32>
      %cst_24 = arith.constant 0.000000e+00 : f32
      %39 = vector.broadcast %cst_24 : f32 to vector<16x512xf32>
      %40 = arith.maximumf %38, %39 : vector<16x512xf32>
      %41 = arith.truncf %40 : vector<16x512xf32> to vector<16x512xbf16>
      %c0_25 = arith.constant 0 : index
      %c0_26 = arith.constant 0 : index
      %42 = vector.load %arg16[%c0_25, %c0_26] : memref<16x512xbf16, #tpu.memory_space<vmem>>, vector<16x512xbf16>
      tpu.vector_store %arg16[%c0_25, %c0_26], %41 {strides = array<i32>} : memref<16x512xbf16, #tpu.memory_space<vmem>>, vector<16x512xbf16>,
    } else {
    }
    %c1_i32_3 = arith.constant 1 : i32
    %8 = arith.cmpi eq, %arg1, %c1_i32_3 : i32
    %9 = arith.extui %8 : i1 to i32
    %c0_i32_4 = arith.constant 0 : i32
    %10 = arith.cmpi ne, %9, %c0_i32_4 : i32
    scf.if %10 {
      %c0 = arith.constant 0 : index
      %c0_5 = arith.constant 0 : index
      %11 = vector.load %arg16[%c0, %c0_5] : memref<16x512xbf16, #tpu.memory_space<vmem>>, vector<16x512xbf16>
      %c0_6 = arith.constant 0 : index
      %c0_7 = arith.constant 0 : index
      %12 = vector.load %arg11[%c0_6, %c0_7] : memref<512x128xbf16, #tpu.memory_space<vmem>>, vector<512x128xbf16>
      %cst = arith.constant dense<0.000000e+00> : vector<16x128xf32>
      %13 = tpu.matmul %11, %12, %cst {dimension_numbers = #tpu.dot_dimension_numbers<[1], [0], [0], [1], [0, 0, 1, 1], [], []>} : vector<16x512xbf16>, vector<512x128xbf16>, vector<16x128xf32> -> vector<16x128xf32>
      %c0_8 = arith.constant 0 : index
      %c0_9 = arith.constant 0 : index
      %14 = vector.load %arg12[%c0_8, %c0_9] : memref<1x128xf32, #tpu.memory_space<vmem>>, vector<1x128xf32>
      %15 = vector.broadcast %14 : vector<1x128xf32> to vector<16x128xf32>
      %16 = arith.addf %13, %15 : vector<16x128xf32>
      %c0_10 = arith.constant 0 : index
      %c0_11 = arith.constant 0 : index
      %17 = vector.load %arg13[%c0_10, %c0_11] : memref<16x128xf32, #tpu.memory_space<vmem>>, vector<16x128xf32>
      tpu.vector_store %arg13[%c0_10, %c0_11], %16 {strides = array<i32>} : memref<16x128xf32, #tpu.memory_space<vmem>>, vector<16x128xf32>,
    } else {
    }
    return
  }
  func.func @transform_0(%arg0: i32, %arg1: i32, %arg2: i32) -> (i32, i32) {
    %c1_i32 = arith.constant 1 : i32
    %0 = arith.subi %c1_i32, %arg1 : i32
    %1 = arith.muli %arg2, %0 : i32
    %c1_i32_0 = arith.constant 1 : i32
    %2 = arith.muli %c1_i32_0, %arg1 : i32
    %3 = arith.addi %1, %2 : i32
    %c0_i32 = arith.constant 0 : i32
    return %arg0, %3 : i32, i32
  }
  func.func @transform_1(%arg0: i32, %arg1: i32, %arg2: i32) -> (i32, i32) {
    %c0_i32 = arith.constant 0 : i32
    %c0_i32_0 = arith.constant 0 : i32
    return %arg0, %c0_i32 : i32, i32
  }
  func.func @transform_2(%arg0: i32, %arg1: i32, %arg2: i32) -> (i32, i32) {
    %c1_i32 = arith.constant 1 : i32
    %0 = arith.subi %c1_i32, %arg1 : i32
    %1 = arith.muli %arg2, %0 : i32
    %c1_i32_0 = arith.constant 1 : i32
    %2 = arith.muli %c1_i32_0, %arg1 : i32
    %3 = arith.addi %1, %2 : i32
    %c0_i32 = arith.constant 0 : i32
    %c0_i32_1 = arith.constant 0 : i32
    return %3, %c0_i32 : i32, i32
  }
  func.func @transform_3(%arg0: i32, %arg1: i32, %arg2: i32) -> (i32, i32) {
    %c0_i32 = arith.constant 0 : i32
    %c0_i32_0 = arith.constant 0 : i32
    %c0_i32_1 = arith.constant 0 : i32
    return %c0_i32, %c0_i32_0 : i32, i32
  }
  func.func @transform_4(%arg0: i32, %arg1: i32, %arg2: i32) -> (i32, i32) {
    %c0_i32 = arith.constant 0 : i32
    %c0_i32_0 = arith.constant 0 : i32
    %c0_i32_1 = arith.constant 0 : i32
    return %c0_i32, %c0_i32_0 : i32, i32
  }
  func.func @transform_5(%arg0: i32, %arg1: i32, %arg2: i32) -> (i32, i32) {
    %c0_i32 = arith.constant 0 : i32
    %c0_i32_0 = arith.constant 0 : i32
    %c0_i32_1 = arith.constant 0 : i32
    return %c0_i32, %c0_i32_0 : i32, i32
  }
  func.func @transform_6(%arg0: i32, %arg1: i32, %arg2: i32) -> (i32, i32) {
    %c0_i32 = arith.constant 0 : i32
    %c0_i32_0 = arith.constant 0 : i32
    %c0_i32_1 = arith.constant 0 : i32
    return %c0_i32, %c0_i32_0 : i32, i32
  }
  func.func @transform_7(%arg0: i32, %arg1: i32, %arg2: i32) -> (i32, i32) {
    %c0_i32 = arith.constant 0 : i32
    %c0_i32_0 = arith.constant 0 : i32
    %c0_i32_1 = arith.constant 0 : i32
    return %c0_i32, %c0_i32_0 : i32, i32
  }
  func.func @transform_8(%arg0: i32, %arg1: i32, %arg2: i32) -> (i32, i32) {
    %0 = arith.muli %arg2, %arg1 : i32
    %c0_i32 = arith.constant 0 : i32
    %c0_i32_0 = arith.constant 0 : i32
    return %c0_i32, %0 : i32, i32
  }
  func.func @transform_9(%arg0: i32, %arg1: i32, %arg2: i32) -> (i32, i32) {
    %0 = arith.muli %arg2, %arg1 : i32
    %c0_i32 = arith.constant 0 : i32
    %c0_i32_0 = arith.constant 0 : i32
    return %c0_i32, %0 : i32, i32
  }
  func.func @transform_10(%arg0: i32, %arg1: i32, %arg2: i32) -> (i32, i32) {
    %0 = arith.muli %arg2, %arg1 : i32
    %c0_i32 = arith.constant 0 : i32
    return %arg0, %0 : i32, i32
  }
  func.func @transform_11(%arg0: i32, %arg1: i32, %arg2: i32) -> (i32, i32) {
    %c0_i32 = arith.constant 0 : i32
    %c0_i32_0 = arith.constant 0 : i32
    return %arg0, %c0_i32 : i32, i32
  }
}

</mosaic_0001>

<llo_original>
// kernel: tpu_custom_call.1
$region0: #{tpu_custom_call.1}
  #allocation0 [shape = 'u32[]', space=smem, size = 0x4, offset = 0x4, fixed_abs, tag = 'smem constant byte address 0x4 - core index']
  #allocation1 [shape = 'u32[144,128]{1,0:T(1,128)}', space=vmem, size = 0x12000, scoped, tag = 'internal scratch']
  #allocation2 [shape = 'f32[16,512]{1,0:T(8,128)}', space=vmem, size = 0x8000, scoped, tag = 'scratch operand']
  #allocation3 [shape = 'bf16[16,512]{1,0:T(16,128)(2,1)}', space=vmem, size = 0x4000, scoped, tag = 'scratch operand']
  %s0 = inlined_call_operand.hbm [shape: f32[16,256], index: 0, kind: input, shape index: {}]
  %s1 = inlined_call_operand.hbm [shape: f32[16,32], index: 1, kind: input, shape index: {}]
  %s2 = inlined_call_operand.hbm [shape: bf16[256,512], index: 2, kind: input, shape index: {}]
  %s3 = inlined_call_operand.vmem [shape: f32[1,512], index: 3, kind: input, shape index: {}]
  %s4 = inlined_call_operand.hbm [shape: bf16[512,128], index: 4, kind: input, shape index: {}]
  %s5 = inlined_call_operand.vmem [shape: f32[1,128], index: 5, kind: input, shape index: {}]
  %s6 = inlined_call_operand.hbm [shape: bf16[32,512], index: 6, kind: input, shape index: {}]
  %s7 = inlined_call_operand.vmem [shape: f32[1,512], index: 7, kind: input, shape index: {}]
  %s8 = inlined_call_operand.hbm [shape: bf16[512,256], index: 8, kind: input, shape index: {}]
  %s9 = inlined_call_operand.vmem [shape: f32[1,256], index: 9, kind: input, shape index: {}]
  %s10 = inlined_call_operand.hbm [shape: f32[16,256], index: 10, kind: output, shape index: {0}]
  %s11 = inlined_call_operand.hbm [shape: f32[16,128], index: 11, kind: output, shape index: {1}]
  %12 = xla_tuple %s10, %s11
  %s13 = sld [smem:[#allocation0]]
  $region121: #{tpu_custom_call.1} parent=0
    _
  %s15 = ssub.s32 1, %s13
  %s16 = scalar_select 0, %s15, %s13
  $region1: #{tpu_custom_call.1} parent=0
    #allocation4 [shape = 'u8[16384]{0}', space=vmem, size = 0x4000, scoped, tag = 'input window, operand 0']
    #allocation5 [shape = 's32[2]{0}', space=sflag, size = 0x8, scoped, tag = 'scoped memory for tpu_custom_call.1']
    #allocation6 [shape = 's32[2]{0}', space=sflag, size = 0x8, scoped, tag = 'scoped memory for tpu_custom_call.1']
    #allocation7 [shape = 'u8[8192]{0}', space=vmem, size = 0x2000, scoped, tag = 'input window, operand 1, single buffered']
    #allocation8 [shape = 's32[1]{0}', space=sflag, size = 0x4, scoped, tag = 'scoped memory for tpu_custom_call.1']
    #allocation9 [shape = 'u8[262144]{0}', space=vmem, size = 0x40000, scoped, tag = 'input window, operand 2']
    #allocation10 [shape = 'u8[131072]{0}', space=vmem, size = 0x20000, scoped, tag = 'input window, operand 4, single buffered']
    #allocation11 [shape = 'u8[32768]{0}', space=vmem, size = 0x8000, scoped, tag = 'input window, operand 6, single buffered']
    #allocation12 [shape = 's32[1]{0}', space=sflag, size = 0x4, scoped, tag = 'scoped memory for tpu_custom_call.1']
    #allocation13 [shape = 'u8[262144]{0}', space=vmem, size = 0x40000, scoped, tag = 'input window, operand 8']
    #allocation14 [shape = 'u8[16384]{0}', space=vmem, size = 0x4000, scoped, tag = 'output window, operand 0']
    #allocation15 [shape = 'u8[8192]{0}', space=vmem, size = 0x2000, scoped, tag = 'output window, operand 1, single buffered']
    #allocation16 [shape = 's32[1]{0}', space=sflag, size = 0x4, scoped, tag = 'scoped memory for tpu_custom_call.1']
    %17 = vsyncpa [#allocation5], 0
    %s18 = scalar_lea.sflag [#allocation5], 1
    %19 = vsyncpa %s18, 0
    %20 = vsyncpa [#allocation8], 0
    %21 = vsyncpa [#allocation12], 0
    %22 = vsyncpa [#allocation6], 0
    %s23 = scalar_lea.sflag [#allocation6], 1
    %24 = vsyncpa %s23, 0
    %25 = vsyncpa [#allocation16], 0
    loop: start=0, step=1, limit=6
    $region2: #{tpu_custom_call.1} parent=1 // loop_pre_header
      _
    $region3: #{tpu_custom_call.1} parent=1 // loop_header
      %s27 = sphi 0, %s31
      %p28 = scmp.ge.s32.totalorder %s27, 6
      %s34 = sphi 0, %s53
      %s35 = sphi 0, %s49
      %s36 = sphi 0, %s45
      %s37 = sphi 0, %s34
      %s38 = sphi 0, %s35
      %s39 = sphi 0, %s36
      %s40 = sphi 0, %s37
      %s41 = sphi 0, %s38
      %s42 = sphi 0, %s39
      %s64 = sphi 0, %s66
      %s67 = sphi 0, %s64
      %s68 = sphi 0, %s67
      %s84 = sphi 0, %s68
      %s90 = sphi 0, %s92
      %s93 = sphi 0, %s90
      %s94 = sphi 0, %s93
      %s110 = sphi 0, %s94
      %s122 = sphi 0, %s124
      %s125 = sphi 0, %s122
      %s126 = sphi 0, %s125
      %s142 = sphi 0, %s126
      %s146 = sphi 0, %s146
      %s148 = sphi 0, %s146
      %s149 = sphi 0, %s148
      %s163 = sphi 0, %s149
      %s167 = sphi 0, %s167
      %s169 = sphi 0, %s167
      %s170 = sphi 0, %s169
      %s184 = sphi 0, %s170
      %s188 = sphi 0, %s188
      %s190 = sphi 0, %s188
      %s191 = sphi 0, %s190
      %s205 = sphi 0, %s191
      %s209 = sphi 0, %s209
      %s211 = sphi 0, %s209
      %s212 = sphi 0, %s211
      %s226 = sphi 0, %s212
      %s230 = sphi 0, %s230
      %s232 = sphi 0, %s230
      %s233 = sphi 0, %s232
      %s247 = sphi 0, %s233
      %s255 = sphi 0, %s257
      %s258 = sphi 0, %s255
      %s259 = sphi 0, %s258
      %s275 = sphi 0, %s259
      %s283 = sphi 0, %s285
      %s286 = sphi 0, %s283
      %s287 = sphi 0, %s286
      %s303 = sphi 0, %s287
      %s313 = sphi 0, %s315
      %s316 = sphi 0, %s313
      %s317 = sphi 0, %s316
      %s333 = sphi 0, %s317
      %s339 = sphi 0, %s341
      %s342 = sphi 0, %s339
      %s343 = sphi 0, %s342
      %s359 = sphi 0, %s343
    $region4: #{tpu_custom_call.1} parent=1 // loop_header_branch
      %30 = sbr.rel (%p28) target = $region8
    $region5: #{tpu_custom_call.1} parent=1 // loop_body
      %s32 = ssub.s32 %s27, 1
      %s33 = ssub.s32 %s27, 2
      %s43 = sadd.s32 1, %s36
      %p44 = scmp.ge.s32.totalorder %s43, 2
      %s45 = scalar_select %p44, 0, %s43
      %s46 = sadd.s32 1, %s35
      %s47 = scalar_select %p44, %s46, %s35
      %p48 = scmp.ge.s32.totalorder %s47, 2
      %s49 = scalar_select %p48, 0, %s47
      %s50 = sadd.s32 1, %s34
      %s51 = scalar_select %p48, %s50, %s34
      %p52 = scmp.ge.s32.totalorder %s51, 1
      %s53 = scalar_select %p52, 0, %s51
      %s54 = ssub.s32 1, %s35
      %s55 = smul.u32 %s36, %s54
      %s56 = sadd.s32 %s55, %s35
      %s57 = ssub.s32 1, %s49
      %s58 = smul.u32 %s45, %s57
      %s59 = sadd.s32 %s58, %s49
      %s60 = ssub.s32 %s34, %s53
      %s61 = ssub.s32 %s56, %s59
      %s62 = sor.u32 %s60, %s61
      %p63 = scmp.eq.s32.totalorder %s62, 0
      %s65 = sadd.s32 %s64, 1
      %s66 = scalar_select %p63, %s64, %s65
      %p69 = pneg %p63
      %p70 = scmp.eq.s32.totalorder %s27, 3
      %p71 = por %p69, %p70
      %p72 = scmp.ne.s32.totalorder %s64, %s67
      %p73 = scmp.eq.s32.totalorder %s27, 0
      %p74 = por %p72, %p73
      %p75 = scmp.ne.s32.totalorder %s64, %s67
      %p76 = scmp.eq.s32.totalorder %s32, 3
      %p77 = por %p75, %p76
      %p78 = scmp.ne.s32.totalorder %s67, %s68
      %p79 = scmp.eq.s32.totalorder %s32, 0
      %p80 = por %p78, %p79
      %p81 = scmp.ne.s32.totalorder %s67, %s68
      %p82 = scmp.eq.s32.totalorder %s33, 3
      %p83 = por %p81, %p82
      %p85 = scmp.ne.s32.totalorder %s68, %s84
      %p86 = scmp.eq.s32.totalorder %s33, 0
      %p87 = por %p85, %p86
      %s88 = ssub.s32 %s34, %s53
      %p89 = scmp.eq.s32.totalorder %s88, 0
      %s91 = sadd.s32 %s90, 1
      %s92 = scalar_select %p89, %s90, %s91
      %p95 = pneg %p89
      %p96 = scmp.eq.s32.totalorder %s27, 3
      %p97 = por %p95, %p96
      %p98 = scmp.ne.s32.totalorder %s90, %s93
      %p99 = scmp.eq.s32.totalorder %s27, 0
      %p100 = por %p98, %p99
      %p101 = scmp.ne.s32.totalorder %s90, %s93
      %p102 = scmp.eq.s32.totalorder %s32, 3
      %p103 = por %p101, %p102
      %p104 = scmp.ne.s32.totalorder %s93, %s94
      %p105 = scmp.eq.s32.totalorder %s32, 0
      %p106 = por %p104, %p105
      %p107 = scmp.ne.s32.totalorder %s93, %s94
      %p108 = scmp.eq.s32.totalorder %s33, 3
      %p109 = por %p107, %p108
      %p111 = scmp.ne.s32.totalorder %s94, %s110
      %p112 = scmp.eq.s32.totalorder %s33, 0
      %p113 = por %p111, %p112
      %s114 = ssub.s32 1, %s35
      %s115 = smul.u32 %s36, %s114
      %s116 = sadd.s32 %s115, %s35
      %s117 = ssub.s32 1, %s49
      %s118 = smul.u32 %s45, %s117
      %s119 = sadd.s32 %s118, %s49
      %s120 = ssub.s32 %s116, %s119
      %p121 = scmp.eq.s32.totalorder %s120, 0
      %s123 = sadd.s32 %s122, 1
      %s124 = scalar_select %p121, %s122, %s123
      %p127 = pneg %p121
      %p128 = scmp.eq.s32.totalorder %s27, 3
      %p129 = por %p127, %p128
      %p130 = scmp.ne.s32.totalorder %s122, %s125
      %p131 = scmp.eq.s32.totalorder %s27, 0
      %p132 = por %p130, %p131
      %p133 = scmp.ne.s32.totalorder %s122, %s125
      %p134 = scmp.eq.s32.totalorder %s32, 3
      %p135 = por %p133, %p134
      %p136 = scmp.ne.s32.totalorder %s125, %s126
      %p137 = scmp.eq.s32.totalorder %s32, 0
      %p138 = por %p136, %p137
      %p139 = scmp.ne.s32.totalorder %s125, %s126
      %p140 = scmp.eq.s32.totalorder %s33, 3
      %p141 = por %p139, %p140
      %p143 = scmp.ne.s32.totalorder %s126, %s142
      %p144 = scmp.eq.s32.totalorder %s33, 0
      %p145 = por %p143, %p144
      %s147 = sadd.s32 %s146, 1
      %p150 = scmp.eq.s32.totalorder %s27, 3
      %p151 = scmp.ne.s32.totalorder %s146, %s148
      %p152 = scmp.eq.s32.totalorder %s27, 0
      %p153 = por %p151, %p152
      %p154 = scmp.ne.s32.totalorder %s146, %s148
      %p155 = scmp.eq.s32.totalorder %s32, 3
      %p156 = por %p154, %p155
      %p157 = scmp.ne.s32.totalorder %s148, %s149
      %p158 = scmp.eq.s32.totalorder %s32, 0
      %p159 = por %p157, %p158
      %p160 = scmp.ne.s32.totalorder %s148, %s149
      %p161 = scmp.eq.s32.totalorder %s33, 3
      %p162 = por %p160, %p161
      %p164 = scmp.ne.s32.totalorder %s149, %s163
      %p165 = scmp.eq.s32.totalorder %s33, 0
      %p166 = por %p164, %p165
      %s168 = sadd.s32 %s167, 1
      %p171 = scmp.eq.s32.totalorder %s27, 3
      %p172 = scmp.ne.s32.totalorder %s167, %s169
      %p173 = scmp.eq.s32.totalorder %s27, 0
      %p174 = por %p172, %p173
      %p175 = scmp.ne.s32.totalorder %s167, %s169
      %p176 = scmp.eq.s32.totalorder %s32, 3
      %p177 = por %p175, %p176
      %p178 = scmp.ne.s32.totalorder %s169, %s170
      %p179 = scmp.eq.s32.totalorder %s32, 0
      %p180 = por %p178, %p179
      %p181 = scmp.ne.s32.totalorder %s169, %s170
      %p182 = scmp.eq.s32.totalorder %s33, 3
      %p183 = por %p181, %p182
      %p185 = scmp.ne.s32.totalorder %s170, %s184
      %p186 = scmp.eq.s32.totalorder %s33, 0
      %p187 = por %p185, %p186
      %s189 = sadd.s32 %s188, 1
      %p192 = scmp.eq.s32.totalorder %s27, 3
      %p193 = scmp.ne.s32.totalorder %s188, %s190
      %p194 = scmp.eq.s32.totalorder %s27, 0
      %p195 = por %p193, %p194
      %p196 = scmp.ne.s32.totalorder %s188, %s190
      %p197 = scmp.eq.s32.totalorder %s32, 3
      %p198 = por %p196, %p197
      %p199 = scmp.ne.s32.totalorder %s190, %s191
      %p200 = scmp.eq.s32.totalorder %s32, 0
      %p201 = por %p199, %p200
      %p202 = scmp.ne.s32.totalorder %s190, %s191
      %p203 = scmp.eq.s32.totalorder %s33, 3
      %p204 = por %p202, %p203
      %p206 = scmp.ne.s32.totalorder %s191, %s205
      %p207 = scmp.eq.s32.totalorder %s33, 0
      %p208 = por %p206, %p207
      %s210 = sadd.s32 %s209, 1
      %p213 = scmp.eq.s32.totalorder %s27, 3
      %p214 = scmp.ne.s32.totalorder %s209, %s211
      %p215 = scmp.eq.s32.totalorder %s27, 0
      %p216 = por %p214, %p215
      %p217 = scmp.ne.s32.totalorder %s209, %s211
      %p218 = scmp.eq.s32.totalorder %s32, 3
      %p219 = por %p217, %p218
      %p220 = scmp.ne.s32.totalorder %s211, %s212
      %p221 = scmp.eq.s32.totalorder %s32, 0
      %p222 = por %p220, %p221
      %p223 = scmp.ne.s32.totalorder %s211, %s212
      %p224 = scmp.eq.s32.totalorder %s33, 3
      %p225 = por %p223, %p224
      %p227 = scmp.ne.s32.totalorder %s212, %s226
      %p228 = scmp.eq.s32.totalorder %s33, 0
      %p229 = por %p227, %p228
      %s231 = sadd.s32 %s230, 1
      %p234 = scmp.eq.s32.totalorder %s27, 3
      %p235 = scmp.ne.s32.totalorder %s230, %s232
      %p236 = scmp.eq.s32.totalorder %s27, 0
      %p237 = por %p235, %p236
      %p238 = scmp.ne.s32.totalorder %s230, %s232
      %p239 = scmp.eq.s32.totalorder %s32, 3
      %p240 = por %p238, %p239
      %p241 = scmp.ne.s32.totalorder %s232, %s233
      %p242 = scmp.eq.s32.totalorder %s32, 0
      %p243 = por %p241, %p242
      %p244 = scmp.ne.s32.totalorder %s232, %s233
      %p245 = scmp.eq.s32.totalorder %s33, 3
      %p246 = por %p244, %p245
      %p248 = scmp.ne.s32.totalorder %s233, %s247
      %p249 = scmp.eq.s32.totalorder %s33, 0
      %p250 = por %p248, %p249
      %s251 = smul.u32 %s36, %s35
      %s252 = smul.u32 %s45, %s49
      %s253 = ssub.s32 %s251, %s252
      %p254 = scmp.eq.s32.totalorder %s253, 0
      %s256 = sadd.s32 %s255, 1
      %s257 = scalar_select %p254, %s255, %s256
      %p260 = pneg %p254
      %p261 = scmp.eq.s32.totalorder %s27, 3
      %p262 = por %p260, %p261
      %p263 = scmp.ne.s32.totalorder %s255, %s258
      %p264 = scmp.eq.s32.totalorder %s27, 0
      %p265 = por %p263, %p264
      %p266 = scmp.ne.s32.totalorder %s255, %s258
      %p267 = scmp.eq.s32.totalorder %s32, 3
      %p268 = por %p266, %p267
      %p269 = scmp.ne.s32.totalorder %s258, %s259
      %p270 = scmp.eq.s32.totalorder %s32, 0
      %p271 = por %p269, %p270
      %p272 = scmp.ne.s32.totalorder %s258, %s259
      %p273 = scmp.eq.s32.totalorder %s33, 3
      %p274 = por %p272, %p273
      %p276 = scmp.ne.s32.totalorder %s259, %s275
      %p277 = scmp.eq.s32.totalorder %s33, 0
      %p278 = por %p276, %p277
      %s279 = smul.u32 %s36, %s35
      %s280 = smul.u32 %s45, %s49
      %s281 = ssub.s32 %s279, %s280
      %p282 = scmp.eq.s32.totalorder %s281, 0
      %s284 = sadd.s32 %s283, 1
      %s285 = scalar_select %p282, %s283, %s284
      %p288 = pneg %p282
      %p289 = scmp.eq.s32.totalorder %s27, 3
      %p290 = por %p288, %p289
      %p291 = scmp.ne.s32.totalorder %s283, %s286
      %p292 = scmp.eq.s32.totalorder %s27, 0
      %p293 = por %p291, %p292
      %p294 = scmp.ne.s32.totalorder %s283, %s286
      %p295 = scmp.eq.s32.totalorder %s32, 3
      %p296 = por %p294, %p295
      %p297 = scmp.ne.s32.totalorder %s286, %s287
      %p298 = scmp.eq.s32.totalorder %s32, 0
      %p299 = por %p297, %p298
      %p300 = scmp.ne.s32.totalorder %s286, %s287
      %p301 = scmp.eq.s32.totalorder %s33, 3
      %p302 = por %p300, %p301
      %p304 = scmp.ne.s32.totalorder %s287, %s303
      %p305 = scmp.eq.s32.totalorder %s33, 0
      %p306 = por %p304, %p305
      %s307 = smul.u32 %s36, %s35
      %s308 = smul.u32 %s45, %s49
      %s309 = ssub.s32 %s34, %s53
      %s310 = ssub.s32 %s307, %s308
      %s311 = sor.u32 %s309, %s310
      %p312 = scmp.eq.s32.totalorder %s311, 0
      %s314 = sadd.s32 %s313, 1
      %s315 = scalar_select %p312, %s313, %s314
      %p318 = pneg %p312
      %p319 = scmp.eq.s32.totalorder %s27, 3
      %p320 = por %p318, %p319
      %p321 = scmp.ne.s32.totalorder %s313, %s316
      %p322 = scmp.eq.s32.totalorder %s27, 0
      %p323 = por %p321, %p322
      %p324 = scmp.ne.s32.totalorder %s313, %s316
      %p325 = scmp.eq.s32.totalorder %s32, 3
      %p326 = por %p324, %p325
      %p327 = scmp.ne.s32.totalorder %s316, %s317
      %p328 = scmp.eq.s32.totalorder %s32, 0
      %p329 = por %p327, %p328
      %p330 = scmp.ne.s32.totalorder %s316, %s317
      %p331 = scmp.eq.s32.totalorder %s33, 3
      %p332 = por %p330, %p331
      %p334 = scmp.ne.s32.totalorder %s317, %s333
      %p335 = scmp.eq.s32.totalorder %s33, 0
      %p336 = por %p334, %p335
      %s337 = ssub.s32 %s34, %s53
      %p338 = scmp.eq.s32.totalorder %s337, 0
      %s340 = sadd.s32 %s339, 1
      %s341 = scalar_select %p338, %s339, %s340
      %p344 = pneg %p338
      %p345 = scmp.eq.s32.totalorder %s27, 3
      %p346 = por %p344, %p345
      %p347 = scmp.ne.s32.totalorder %s339, %s342
      %p348 = scmp.eq.s32.totalorder %s27, 0
      %p349 = por %p347, %p348
      %p350 = scmp.ne.s32.totalorder %s339, %s342
      %p351 = scmp.eq.s32.totalorder %s32, 3
      %p352 = por %p350, %p351
      %p353 = scmp.ne.s32.totalorder %s342, %s343
      %p354 = scmp.eq.s32.totalorder %s32, 0
      %p355 = por %p353, %p354
      %p356 = scmp.ne.s32.totalorder %s342, %s343
      %p357 = scmp.eq.s32.totalorder %s33, 3
      %p358 = por %p356, %p357
      %p360 = scmp.ne.s32.totalorder %s343, %s359
      %p361 = scmp.eq.s32.totalorder %s33, 0
      %p362 = por %p360, %p361
      %p363 = scmp.le.s32.totalorder 1, %s27
      %p364 = scmp.lt.s32.totalorder %s27, 5
      %p365 = pnand %p363, %p364
      %p366 = pneg %p365
      // Predicated region
      $region9: #{tpu_custom_call.1} parent=5 // pred_check
        _
      $region10: #{tpu_custom_call.1} parent=5 // pred_check_branch
        %368 = sbr.rel (%p365) target = $region12
      $region11: #{tpu_custom_call.1} parent=5 // pred_region
        %s369 = ssub.s32 %s27, 1
        // Predicated region
        $region13: #{tpu_custom_call.1} parent=11 // pred_check
          %p370 = pneg %p106
        $region14: #{tpu_custom_call.1} parent=11 // pred_check_branch
          %372 = sbr.rel (%p370) target = $region16
        $region15: #{tpu_custom_call.1} parent=11 // pred_region
          %s373 = smul.u32 2, %s37
          %s375 = ssub.s32 256, 256
          %376 = vsyncadd [#allocation8], %s375
          %s377 = smul.addr %s373, 128
          %s378 = scalar_lea.hbm %s1, %s377
          %s379 = sshll.u32 [#allocation7], 4
          %s380 = int_to_ptr.vmem [resolvable:$true] %s379
          %385 = dma.hbm_to_vmem [thread:$0]  %s378, 256, %s380, [#allocation8], 128, 128, 8
        $region16: #{tpu_custom_call.1} parent=11 // pred_fallthru
          _
        // Predicated region
        $region17: #{tpu_custom_call.1} parent=11 // pred_check
          %p386 = pneg %p159
        $region18: #{tpu_custom_call.1} parent=11 // pred_check_branch
          %388 = sbr.rel (%p386) target = $region20
        $region19: #{tpu_custom_call.1} parent=11 // pred_region
          _
        $region20: #{tpu_custom_call.1} parent=11 // pred_fallthru
          _
        // Predicated region
        $region21: #{tpu_custom_call.1} parent=11 // pred_check
          %p389 = pneg %p180
        $region22: #{tpu_custom_call.1} parent=11 // pred_check_branch
          %391 = sbr.rel (%p389) target = $region24
        $region23: #{tpu_custom_call.1} parent=11 // pred_region
          %s393 = ssub.s32 4096, 4096
          %394 = vsyncadd [#allocation8], %s393
          %s395 = sshll.u32 [#allocation10], 4
          %s396 = int_to_ptr.vmem [resolvable:$true] %s395
          %401 = dma.hbm_to_vmem [thread:$0]  %s4, 4096, %s396, [#allocation8], 64, 64, 4
        $region24: #{tpu_custom_call.1} parent=11 // pred_fallthru
          _
        // Predicated region
        $region25: #{tpu_custom_call.1} parent=11 // pred_check
          %p402 = pneg %p201
        $region26: #{tpu_custom_call.1} parent=11 // pred_check_branch
          %404 = sbr.rel (%p402) target = $region28
        $region27: #{tpu_custom_call.1} parent=11 // pred_region
          _
        $region28: #{tpu_custom_call.1} parent=11 // pred_fallthru
          _
        // Predicated region
        $region29: #{tpu_custom_call.1} parent=11 // pred_check
          %p405 = pneg %p222
        $region30: #{tpu_custom_call.1} parent=11 // pred_check_branch
          %407 = sbr.rel (%p405) target = $region32
        $region31: #{tpu_custom_call.1} parent=11 // pred_region
          %s409 = ssub.s32 1024, 1024
          %410 = vsyncadd [#allocation12], %s409
          %s411 = sshll.u32 [#allocation11], 4
          %s412 = int_to_ptr.vmem [resolvable:$true] %s411
          %417 = dma.hbm_to_vmem [thread:$0]  %s6, 1024, %s412, [#allocation12], 256, 256, 16
        $region32: #{tpu_custom_call.1} parent=11 // pred_fallthru
          _
        // Predicated region
        $region33: #{tpu_custom_call.1} parent=11 // pred_check
          %p418 = pneg %p243
        $region34: #{tpu_custom_call.1} parent=11 // pred_check_branch
          %420 = sbr.rel (%p418) target = $region36
        $region35: #{tpu_custom_call.1} parent=11 // pred_region
          _
        $region36: #{tpu_custom_call.1} parent=11 // pred_fallthru
          _
      $region12: #{tpu_custom_call.1} parent=5 // pred_fallthru
        _
      %p421 = scmp.lt.s32.totalorder %s27, 4
      // Predicated region
      $region37: #{tpu_custom_call.1} parent=5 // pred_check
        %p422 = pneg %p421
      $region38: #{tpu_custom_call.1} parent=5 // pred_check_branch
        %424 = sbr.rel (%p422) target = $region40
      $region39: #{tpu_custom_call.1} parent=5 // pred_region
        // Predicated region
        $region41: #{tpu_custom_call.1} parent=39 // pred_check
          %p425 = pneg %p74
        $region42: #{tpu_custom_call.1} parent=39 // pred_check_branch
          %427 = sbr.rel (%p425) target = $region44
        $region43: #{tpu_custom_call.1} parent=39 // pred_region
          %s428 = sand.u32 %s27, 1
          %s429 = scalar_lea.sflag [#allocation5], %s428
          %s430 = sand.u32 %s64, 1
          %s431 = smul.addr %s430, 16
          %s432 = scalar_lea.vmem [#allocation4], %s431
          %s433 = ssub.s32 1, %s35
          %s434 = smul.u32 %s36, %s433
          %s435 = sadd.s32 %s434, %s35
          %s436 = smul.u32 2, %s34
          %s438 = ssub.s32 256, 256
          %439 = vsyncadd %s429, %s438
          %s440 = smul.addr %s436, 2
          %s441 = sadd.s32 %s435, %s440
          %s442 = smul.addr %s441, 128
          %s443 = scalar_lea.hbm %s0, %s442
          %s444 = sshll.u32 %s432, 4
          %s445 = int_to_ptr.vmem [resolvable:$true] %s444
          %450 = dma.hbm_to_vmem [thread:$0]  %s443, 256, %s445, %s429, 256, 128, 8
        $region44: #{tpu_custom_call.1} parent=39 // pred_fallthru
          _
        // Predicated region
        $region45: #{tpu_custom_call.1} parent=39 // pred_check
          %p451 = pneg %p132
        $region46: #{tpu_custom_call.1} parent=39 // pred_check_branch
          %453 = sbr.rel (%p451) target = $region48
        $region47: #{tpu_custom_call.1} parent=39 // pred_region
          %s454 = sand.u32 %s27, 1
          %s455 = scalar_lea.sflag [#allocation5], %s454
          %s456 = sand.u32 %s122, 1
          %s457 = smul.addr %s456, 256
          %s458 = scalar_lea.vmem [#allocation9], %s457
          %s459 = ssub.s32 1, %s35
          %s460 = smul.u32 %s36, %s459
          %s461 = sadd.s32 %s460, %s35
          %s462 = smul.u32 16, %s461
          %s464 = ssub.s32 4096, 4096
          %465 = vsyncadd %s455, %s464
          %s466 = smul.addr %s462, 4
          %s467 = smul.addr %s466, 64
          %s468 = scalar_lea.hbm %s2, %s467
          %s469 = sshll.u32 %s458, 4
          %s470 = int_to_ptr.vmem [resolvable:$true] %s469
          %475 = dma.hbm_to_vmem [thread:$0]  %s468, 4096, %s470, %s455, 256, 256, 16
        $region48: #{tpu_custom_call.1} parent=39 // pred_fallthru
          _
        // Predicated region
        $region49: #{tpu_custom_call.1} parent=39 // pred_check
          %p476 = pneg %p265
        $region50: #{tpu_custom_call.1} parent=39 // pred_check_branch
          %478 = sbr.rel (%p476) target = $region52
        $region51: #{tpu_custom_call.1} parent=39 // pred_region
          %s479 = sand.u32 %s27, 1
          %s480 = scalar_lea.sflag [#allocation5], %s479
          %s481 = sand.u32 %s255, 1
          %s482 = smul.addr %s481, 256
          %s483 = scalar_lea.vmem [#allocation13], %s482
          %s484 = smul.u32 %s36, %s35
          %s486 = ssub.s32 4096, 4096
          %487 = vsyncadd %s480, %s486
          %s488 = smul.addr %s484, 64
          %s489 = scalar_lea.hbm %s8, %s488
          %s490 = sshll.u32 %s483, 4
          %s491 = int_to_ptr.vmem [resolvable:$true] %s490
          %496 = dma.hbm_to_vmem [thread:$0]  %s489, 4096, %s491, %s480, 128, 64, 4
        $region52: #{tpu_custom_call.1} parent=39 // pred_fallthru
          _
        // Predicated region
        $region53: #{tpu_custom_call.1} parent=39 // pred_check
          %p497 = pneg %p293
        $region54: #{tpu_custom_call.1} parent=39 // pred_check_branch
          %499 = sbr.rel (%p497) target = $region56
        $region55: #{tpu_custom_call.1} parent=39 // pred_region
          %s500 = smul.u32 %s36, %s35
          %p501 = scmp.lt.s32.totalorder %s500, 1
          %s502 = scalar_select %p501, %s500, 1
          %s503 = scalar_lea.vmem %s9, %s502
          %s504 = smul.u32 %s36, %s35
        $region56: #{tpu_custom_call.1} parent=39 // pred_fallthru
          _
      $region40: #{tpu_custom_call.1} parent=5 // pred_fallthru
        _
      %p505 = scmp.le.s32.totalorder 1, %s27
      %p506 = scmp.lt.s32.totalorder %s27, 5
      %p507 = pnand %p505, %p506
      %p508 = pneg %p507
      // Predicated region
      $region57: #{tpu_custom_call.1} parent=5 // pred_check
        _
      $region58: #{tpu_custom_call.1} parent=5 // pred_check_branch
        %510 = sbr.rel (%p507) target = $region60
      $region59: #{tpu_custom_call.1} parent=5 // pred_region
        %s511 = ssub.s32 %s27, 1
        %s512 = sand.u32 %s32, 1
        %s513 = scalar_lea.sflag [#allocation5], %s512
        %s514 = sand.u32 %s67, 1
        %s515 = smul.addr %s514, 16
        %s516 = scalar_lea.vmem [#allocation4], %s515
        // Predicated region
        $region61: #{tpu_custom_call.1} parent=59 // pred_check
          %p517 = pneg %p80
        $region62: #{tpu_custom_call.1} parent=59 // pred_check_branch
          %519 = sbr.rel (%p517) target = $region64
        $region63: #{tpu_custom_call.1} parent=59 // pred_region
          %520 = dma.done %s513, 256
        $region64: #{tpu_custom_call.1} parent=59 // pred_fallthru
          _
        // Predicated region
        $region65: #{tpu_custom_call.1} parent=59 // pred_check
          %p521 = pneg %p106
        $region66: #{tpu_custom_call.1} parent=59 // pred_check_branch
          %523 = sbr.rel (%p521) target = $region68
        $region67: #{tpu_custom_call.1} parent=59 // pred_region
          %524 = dma.done [#allocation8], 256
        $region68: #{tpu_custom_call.1} parent=59 // pred_fallthru
          _
        %s525 = sand.u32 %s32, 1
        %s526 = scalar_lea.sflag [#allocation5], %s525
        %s527 = sand.u32 %s125, 1
        %s528 = smul.addr %s527, 256
        %s529 = scalar_lea.vmem [#allocation9], %s528
        // Predicated region
        $region69: #{tpu_custom_call.1} parent=59 // pred_check
          %p530 = pneg %p138
        $region70: #{tpu_custom_call.1} parent=59 // pred_check_branch
          %532 = sbr.rel (%p530) target = $region72
        $region71: #{tpu_custom_call.1} parent=59 // pred_region
          %533 = dma.done %s526, 4096
        $region72: #{tpu_custom_call.1} parent=59 // pred_fallthru
          _
        // Predicated region
        $region73: #{tpu_custom_call.1} parent=59 // pred_check
          %p534 = pneg %p180
        $region74: #{tpu_custom_call.1} parent=59 // pred_check_branch
          %536 = sbr.rel (%p534) target = $region76
        $region75: #{tpu_custom_call.1} parent=59 // pred_region
          %537 = dma.done [#allocation8], 4096
        $region76: #{tpu_custom_call.1} parent=59 // pred_fallthru
          _
        // Predicated region
        $region77: #{tpu_custom_call.1} parent=59 // pred_check
          %p538 = pneg %p222
        $region78: #{tpu_custom_call.1} parent=59 // pred_check_branch
          %540 = sbr.rel (%p538) target = $region80
        $region79: #{tpu_custom_call.1} parent=59 // pred_region
          %541 = dma.done [#allocation12], 1024
        $region80: #{tpu_custom_call.1} parent=59 // pred_fallthru
          _
        %s542 = sand.u32 %s32, 1
        %s543 = scalar_lea.sflag [#allocation5], %s542
        %s544 = sand.u32 %s258, 1
        %s545 = smul.addr %s544, 256
        %s546 = scalar_lea.vmem [#allocation13], %s545
        // Predicated region
        $region81: #{tpu_custom_call.1} parent=59 // pred_check
          %p547 = pneg %p271
        $region82: #{tpu_custom_call.1} parent=59 // pred_check_branch
          %549 = sbr.rel (%p547) target = $region84
        $region83: #{tpu_custom_call.1} parent=59 // pred_region
          %550 = dma.done %s543, 4096
        $region84: #{tpu_custom_call.1} parent=59 // pred_fallthru
          _
        %s551 = sand.u32 %s32, 1
        %s552 = scalar_lea.sflag [#allocation5], %s551
        %s553 = sand.u32 %s67, 1
        %s554 = smul.addr %s553, 16
        %s555 = scalar_lea.vmem [#allocation4], %s554
        %p556 = pneg %p80
        %p557 = pneg %p77
        %p558 = pneg %p106
        %p559 = pneg %p103
        %s560 = sand.u32 %s32, 1
        %s561 = scalar_lea.sflag [#allocation5], %s560
        %s562 = sand.u32 %s125, 1
        %s563 = smul.addr %s562, 256
        %s564 = scalar_lea.vmem [#allocation9], %s563
        %p565 = pneg %p138
        %p566 = pneg %p135
        %p567 = pneg %p159
        %p568 = pneg %p156
        %p569 = pneg %p180
        %p570 = pneg %p177
        %p571 = pneg %p201
        %p572 = pneg %p198
        %p573 = pneg %p222
        %p574 = pneg %p219
        %p575 = pneg %p243
        %p576 = pneg %p240
        %s577 = sand.u32 %s32, 1
        %s578 = scalar_lea.sflag [#allocation5], %s577
        %s579 = sand.u32 %s258, 1
        %s580 = smul.addr %s579, 256
        %s581 = scalar_lea.vmem [#allocation13], %s580
        %p582 = pneg %p271
        %p583 = pneg %p268
        %s584 = smul.u32 %s39, %s38
        %p585 = scmp.lt.s32.totalorder %s584, 1
        %s586 = scalar_select %p585, %s584, 1
        %s587 = scalar_lea.vmem %s9, %s586
        %p588 = pneg %p299
        %p589 = pneg %p296
        %p590 = pneg %p329
        %p591 = pneg %p326
        %s592 = sand.u32 %s316, 1
        %s593 = scalar_lea.sflag [#allocation6], %s592
        %s594 = sand.u32 %s316, 1
        %s595 = smul.addr %s594, 16
        %s596 = scalar_lea.vmem [#allocation14], %s595
        %p597 = pneg %p355
        %p598 = pneg %p352
        %s599 = ssub.s32 1, %s38
        %s600 = smul.u32 %s39, %s599
        %s601 = sadd.s32 %s600, %s38
        %s602 = smul.u32 2, %s37
        %s603 = smul.u32 2, %s37
        %s604 = ssub.s32 1, %s38
        %s605 = smul.u32 %s39, %s604
        %s606 = sadd.s32 %s605, %s38
        %s607 = smul.u32 16, %s606
        %s608 = smul.u32 %s39, %s38
        %s609 = smul.u32 %s39, %s38
        %p610 = scmp.lt.s32.totalorder %s609, 1
        %s611 = scalar_select %p610, %s609, 1
        %s612 = scalar_lea.vmem %s9, %s611
        %s613 = smul.u32 %s39, %s38
        %s614 = smul.u32 %s39, %s38
        %s615 = smul.u32 2, %s37
        %s616 = smul.u32 2, %s37
        %p618 = scmp.eq.s32.totalorder %s38, 0
        // Predicated region
        $region85: #{tpu_custom_call.1} parent=59 // pred_check
          %p619 = pneg %p618
        $region86: #{tpu_custom_call.1} parent=59 // pred_check_branch
          %621 = sbr.rel (%p619) target = $region88
        $region87: #{tpu_custom_call.1} parent=59 // pred_region
          %p622 = scmp.eq.s32.totalorder %s39, 0
          // Predicated region
          $region89: #{tpu_custom_call.1} parent=87 // pred_check
            %p623 = pneg %p622
          $region90: #{tpu_custom_call.1} parent=87 // pred_check_branch
            %625 = sbr.rel (%p623) target = $region92
          $region91: #{tpu_custom_call.1} parent=87 // pred_region
            %626 = vst [vmem:[#allocation2] sm:$0xff] 0.0
            %627 = vst [vmem:[#allocation2 + $0x8] sm:$0xff] 0.0
            %628 = vst [vmem:[#allocation2 + $0x10] sm:$0xff] 0.0
            %629 = vst [vmem:[#allocation2 + $0x18] sm:$0xff] 0.0
            %630 = vst [vmem:[#allocation2 + $0x20] sm:$0xff] 0.0
            %631 = vst [vmem:[#allocation2 + $0x28] sm:$0xff] 0.0
            %632 = vst [vmem:[#allocation2 + $0x30] sm:$0xff] 0.0
            %633 = vst [vmem:[#allocation2 + $0x38] sm:$0xff] 0.0
          $region92: #{tpu_custom_call.1} parent=87 // pred_fallthru
            _
          %v634 = vld [vmem:[#allocation2] sm:$0xff]
          %v635 = vld [vmem:[#allocation2 + $0x8] sm:$0xff]
          %v636 = vld [vmem:[#allocation2 + $0x10] sm:$0xff]
          %v637 = vld [vmem:[#allocation2 + $0x18] sm:$0xff]
          %v638 = vld [vmem:[#allocation2 + $0x20] sm:$0xff]
          %v639 = vld [vmem:[#allocation2 + $0x28] sm:$0xff]
          %v640 = vld [vmem:[#allocation2 + $0x30] sm:$0xff]
          %v641 = vld [vmem:[#allocation2 + $0x38] sm:$0xff]
          %v642 = vld [vmem:[%s516] sm:$0xff]
          %v643 = vld [vmem:[%s516 + $0x8] sm:$0xff]
          %v644 = vpack.c.bf16 %v643, %v642
          %v645 = vld [vmem:[%s529] sm:$0xff]
          %v646 = vld [vmem:[%s529 + $0x8] sm:$0xff]
          %v647 = vld [vmem:[%s529 + $0x10] sm:$0xff]
          %v648 = vld [vmem:[%s529 + $0x18] sm:$0xff]
          %v649 = vld [vmem:[%s529 + $0x20] sm:$0xff]
          %v650 = vld [vmem:[%s529 + $0x28] sm:$0xff]
          %v651 = vld [vmem:[%s529 + $0x30] sm:$0xff]
          %v652 = vld [vmem:[%s529 + $0x38] sm:$0xff]
          %v653 = vld [vmem:[%s529 + $0x40] sm:$0xff]
          %v654 = vld [vmem:[%s529 + $0x48] sm:$0xff]
          %v655 = vld [vmem:[%s529 + $0x50] sm:$0xff]
          %v656 = vld [vmem:[%s529 + $0x58] sm:$0xff]
          %v657 = vld [vmem:[%s529 + $0x60] sm:$0xff]
          %v658 = vld [vmem:[%s529 + $0x68] sm:$0xff]
          %v659 = vld [vmem:[%s529 + $0x70] sm:$0xff]
          %v660 = vld [vmem:[%s529 + $0x78] sm:$0xff]
          %v661 = vld [vmem:[%s529 + $0x80] sm:$0xff]
          %v662 = vld [vmem:[%s529 + $0x88] sm:$0xff]
          %v663 = vld [vmem:[%s529 + $0x90] sm:$0xff]
          %v664 = vld [vmem:[%s529 + $0x98] sm:$0xff]
          %v665 = vld [vmem:[%s529 + $0xa0] sm:$0xff]
          %v666 = vld [vmem:[%s529 + $0xa8] sm:$0xff]
          %v667 = vld [vmem:[%s529 + $0xb0] sm:$0xff]
          %v668 = vld [vmem:[%s529 + $0xb8] sm:$0xff]
          %v669 = vld [vmem:[%s529 + $0xc0] sm:$0xff]
          %v670 = vld [vmem:[%s529 + $0xc8] sm:$0xff]
          %v671 = vld [vmem:[%s529 + $0xd0] sm:$0xff]
          %v672 = vld [vmem:[%s529 + $0xd8] sm:$0xff]
          %v673 = vld [vmem:[%s529 + $0xe0] sm:$0xff]
          %v674 = vld [vmem:[%s529 + $0xe8] sm:$0xff]
          %v675 = vld [vmem:[%s529 + $0xf0] sm:$0xff]
          %v676 = vld [vmem:[%s529 + $0xf8] sm:$0xff]
          %v709 = vunpack.c.l.b16 %v645
          %v710 = vunpack.c.h.b16 %v645
          %v711 = vunpack.c.l.b16 %v646
          %v712 = vunpack.c.h.b16 %v646
          %v713 = vunpack.c.l.b16 %v647
          %v714 = vunpack.c.h.b16 %v647
          %v715 = vunpack.c.l.b16 %v648
          %v716 = vunpack.c.h.b16 %v648
          %v717 = vunpack.c.l.b16 %v649
          %v718 = vunpack.c.h.b16 %v649
          %v719 = vunpack.c.l.b16 %v650
          %v720 = vunpack.c.h.b16 %v650
          %v721 = vunpack.c.l.b16 %v651
          %v722 = vunpack.c.h.b16 %v651
          %v723 = vunpack.c.l.b16 %v652
          %v724 = vunpack.c.h.b16 %v652
          %v725 = vunpack.c.l.b16 %v653
          %v726 = vunpack.c.h.b16 %v653
          %v727 = vunpack.c.l.b16 %v654
          %v728 = vunpack.c.h.b16 %v654
          %v729 = vunpack.c.l.b16 %v655
          %v730 = vunpack.c.h.b16 %v655
          %v731 = vunpack.c.l.b16 %v656
          %v732 = vunpack.c.h.b16 %v656
          %v733 = vunpack.c.l.b16 %v657
          %v734 = vunpack.c.h.b16 %v657
          %v735 = vunpack.c.l.b16 %v658
          %v736 = vunpack.c.h.b16 %v658
          %v737 = vunpack.c.l.b16 %v659
          %v738 = vunpack.c.h.b16 %v659
          %v739 = vunpack.c.l.b16 %v660
          %v740 = vunpack.c.h.b16 %v660
          %v741 = vunpack.c.l.b16 %v661
          %v742 = vunpack.c.h.b16 %v661
          %v743 = vunpack.c.l.b16 %v662
          %v744 = vunpack.c.h.b16 %v662
          %v745 = vunpack.c.l.b16 %v663
          %v746 = vunpack.c.h.b16 %v663
          %v747 = vunpack.c.l.b16 %v664
          %v748 = vunpack.c.h.b16 %v664
          %v749 = vunpack.c.l.b16 %v665
          %v750 = vunpack.c.h.b16 %v665
          %v751 = vunpack.c.l.b16 %v666
          %v752 = vunpack.c.h.b16 %v666
          %v753 = vunpack.c.l.b16 %v667
          %v754 = vunpack.c.h.b16 %v667
          %v755 = vunpack.c.l.b16 %v668
          %v756 = vunpack.c.h.b16 %v668
          %v757 = vunpack.c.l.b16 %v669
          %v758 = vunpack.c.h.b16 %v669
          %v759 = vunpack.c.l.b16 %v670
          %v760 = vunpack.c.h.b16 %v670
          %v761 = vunpack.c.l.b16 %v671
          %v762 = vunpack.c.h.b16 %v671
          %v763 = vunpack.c.l.b16 %v672
          %v764 = vunpack.c.h.b16 %v672
          %v765 = vunpack.c.l.b16 %v673
          %v766 = vunpack.c.h.b16 %v673
          %v767 = vunpack.c.l.b16 %v674
          %v768 = vunpack.c.h.b16 %v674
          %v769 = vunpack.c.l.b16 %v675
          %v770 = vunpack.c.h.b16 %v675
          %v771 = vunpack.c.l.b16 %v676
          %v772 = vunpack.c.h.b16 %v676
          %v773 = vpack.c.b16 %v713, %v709
          %v774 = vpack.c.b16 %v714, %v710
          %v775 = vpack.c.b16 %v715, %v711
          %v776 = vpack.c.b16 %v716, %v712
          %v777 = vpack.c.b16 %v721, %v717
          %v778 = vpack.c.b16 %v722, %v718
          %v779 = vpack.c.b16 %v723, %v719
          %v780 = vpack.c.b16 %v724, %v720
          %v781 = vpack.c.b16 %v729, %v725
          %v782 = vpack.c.b16 %v730, %v726
          %v783 = vpack.c.b16 %v731, %v727
          %v784 = vpack.c.b16 %v732, %v728
          %v785 = vpack.c.b16 %v737, %v733
          %v786 = vpack.c.b16 %v738, %v734
          %v787 = vpack.c.b16 %v739, %v735
          %v788 = vpack.c.b16 %v740, %v736
          %v789 = vpack.c.b16 %v745, %v741
          %v790 = vpack.c.b16 %v746, %v742
          %v791 = vpack.c.b16 %v747, %v743
          %v792 = vpack.c.b16 %v748, %v744
          %v793 = vpack.c.b16 %v753, %v749
          %v794 = vpack.c.b16 %v754, %v750
          %v795 = vpack.c.b16 %v755, %v751
          %v796 = vpack.c.b16 %v756, %v752
          %v797 = vpack.c.b16 %v761, %v757
          %v798 = vpack.c.b16 %v762, %v758
          %v799 = vpack.c.b16 %v763, %v759
          %v800 = vpack.c.b16 %v764, %v760
          %v801 = vpack.c.b16 %v769, %v765
          %v802 = vpack.c.b16 %v770, %v766
          %v803 = vpack.c.b16 %v771, %v767
          %v804 = vpack.c.b16 %v772, %v768
          %837 = vmatprep.subr.bf16.mxu0 %v774
          %838 = vmatpush1.bf16.msra.mxu0 %v773
          %839 = vmatprep.subr.bf16.mxu0 %v778
          %840 = vmatpush1.bf16.msra.mxu0 %v777
          %841 = vmatprep.subr.bf16.mxu0 %v782
          %842 = vmatpush1.bf16.msra.mxu0 %v781
          %843 = vmatprep.subr.bf16.mxu0 %v786
          %844 = vmatpush1.bf16.msra.mxu0 %v785
          %845 = vmatprep.subr.bf16.mxu0 %v790
          %846 = vmatpush1.bf16.msra.mxu0 %v789
          %847 = vmatprep.subr.bf16.mxu0 %v794
          %848 = vmatpush1.bf16.msra.mxu0 %v793
          %849 = vmatprep.subr.bf16.mxu0 %v798
          %850 = vmatpush1.bf16.msra.mxu0 %v797
          %851 = vmatprep.subr.bf16.mxu0 %v802
          %852 = vmatpush1.bf16.msra.mxu0 %v801
          %853 = vmatprep.subr.bf16.mxu0 0
          %854 = vmatpush1.bf16.msra.mxu0 0
          %855 = vmatprep.subr.bf16.mxu0 0
          %856 = vmatpush1.bf16.msra.mxu0 0
          %857 = vmatprep.subr.bf16.mxu0 0
          %858 = vmatpush1.bf16.msra.mxu0 0
          %859 = vmatprep.subr.bf16.mxu0 0
          %860 = vmatpush1.bf16.msra.mxu0 0
          %861 = vmatprep.subr.bf16.mxu0 0
          %862 = vmatpush1.bf16.msra.mxu0 0
          %863 = vmatprep.subr.bf16.mxu0 0
          %864 = vmatpush1.bf16.msra.mxu0 0
          %865 = vmatprep.subr.bf16.mxu0 0
          %866 = vmatpush1.bf16.msra.mxu0 0
          %867 = vmatprep.subr.bf16.mxu0 0
          %868 = vmatpush1.bf16.msra.mxu0 0
          %869 = vmatprep.mubr.bf16.mxu0 0
          %870 = vmatmul.mubr.bf16.gmra.mrb[0].mxu0 %v644
          %v871 = vpop.f32.mrb[0].mxu0
          %v872 = vadd.f32 0.0, %v871
          %v873 = vpop.f32.mrb[0].mxu0
          %v874 = vadd.f32 0.0, %v873
          %v875 = vpop.f32.mrb[0].mxu0
          %v876 = vadd.f32 0.0, %v875
          %v877 = vpop.f32.mrb[0].mxu0
          %v878 = vadd.f32 0.0, %v877
          %879 = vdwg.mxu0
          %880 = vmatprep.subr.bf16.mxu0 %v776
          %881 = vmatpush1.bf16.msra.mxu0 %v775
          %882 = vmatprep.subr.bf16.mxu0 %v780
          %883 = vmatpush1.bf16.msra.mxu0 %v779
          %884 = vmatprep.subr.bf16.mxu0 %v784
          %885 = vmatpush1.bf16.msra.mxu0 %v783
          %886 = vmatprep.subr.bf16.mxu0 %v788
          %887 = vmatpush1.bf16.msra.mxu0 %v787
          %888 = vmatprep.subr.bf16.mxu0 %v792
          %889 = vmatpush1.bf16.msra.mxu0 %v791
          %890 = vmatprep.subr.bf16.mxu0 %v796
          %891 = vmatpush1.bf16.msra.mxu0 %v795
          %892 = vmatprep.subr.bf16.mxu0 %v800
          %893 = vmatpush1.bf16.msra.mxu0 %v799
          %894 = vmatprep.subr.bf16.mxu0 %v804
          %895 = vmatpush1.bf16.msra.mxu0 %v803
          %896 = vmatprep.subr.bf16.mxu0 0
          %897 = vmatpush1.bf16.msra.mxu0 0
          %898 = vmatprep.subr.bf16.mxu0 0
          %899 = vmatpush1.bf16.msra.mxu0 0
          %900 = vmatprep.subr.bf16.mxu0 0
          %901 = vmatpush1.bf16.msra.mxu0 0
          %902 = vmatprep.subr.bf16.mxu0 0
          %903 = vmatpush1.bf16.msra.mxu0 0
          %904 = vmatprep.subr.bf16.mxu0 0
          %905 = vmatpush1.bf16.msra.mxu0 0
          %906 = vmatprep.subr.bf16.mxu0 0
          %907 = vmatpush1.bf16.msra.mxu0 0
          %908 = vmatprep.subr.bf16.mxu0 0
          %909 = vmatpush1.bf16.msra.mxu0 0
          %910 = vmatprep.subr.bf16.mxu0 0
          %911 = vmatpush1.bf16.msra.mxu0 0
          %912 = vmatprep.mubr.bf16.mxu0 0
          %913 = vmatmul.mubr.bf16.gmra.mrb[0].mxu0 %v644
          %v914 = vpop.f32.mrb[0].mxu0
          %v915 = vadd.f32 0.0, %v914
          %v916 = vpop.f32.mrb[0].mxu0
          %v917 = vadd.f32 0.0, %v916
          %v918 = vpop.f32.mrb[0].mxu0
          %v919 = vadd.f32 0.0, %v918
          %v920 = vpop.f32.mrb[0].mxu0
          %v921 = vadd.f32 0.0, %v920
          %922 = vdwg.mxu0
          %v923 = vadd.f32 %v634, %v872
          %v924 = vadd.f32 %v635, %v874
          %v925 = vadd.f32 %v636, %v915
          %v926 = vadd.f32 %v637, %v917
          %v927 = vadd.f32 %v638, %v876
          %v928 = vadd.f32 %v639, %v878
          %v929 = vadd.f32 %v640, %v919
          %v930 = vadd.f32 %v641, %v921
          %931 = vst [vmem:[#allocation2] sm:$0xff] %v923
          %932 = vst [vmem:[#allocation2 + $0x8] sm:$0xff] %v924
          %933 = vst [vmem:[#allocation2 + $0x10] sm:$0xff] %v925
          %934 = vst [vmem:[#allocation2 + $0x18] sm:$0xff] %v926
          %935 = vst [vmem:[#allocation2 + $0x20] sm:$0xff] %v927
          %936 = vst [vmem:[#allocation2 + $0x28] sm:$0xff] %v928
          %937 = vst [vmem:[#allocation2 + $0x30] sm:$0xff] %v929
          %938 = vst [vmem:[#allocation2 + $0x38] sm:$0xff] %v930
        $region88: #{tpu_custom_call.1} parent=59 // pred_fallthru
          _
        %p939 = scmp.eq.s32.totalorder %s39, 1
        %p940 = pnand %p618, %p939
        %p941 = pneg %p940
        // Predicated region
        $region93: #{tpu_custom_call.1} parent=59 // pred_check
          _
        $region94: #{tpu_custom_call.1} parent=59 // pred_check_branch
          %943 = sbr.rel (%p940) target = $region96
        $region95: #{tpu_custom_call.1} parent=59 // pred_region
          %v944 = vld [vmem:[#allocation2] sm:$0xff]
          %v945 = vld [vmem:[#allocation2 + $0x8] sm:$0xff]
          %v946 = vld [vmem:[#allocation2 + $0x10] sm:$0xff]
          %v947 = vld [vmem:[#allocation2 + $0x18] sm:$0xff]
          %v948 = vld [vmem:[#allocation2 + $0x20] sm:$0xff]
          %v949 = vld [vmem:[#allocation2 + $0x28] sm:$0xff]
          %v950 = vld [vmem:[#allocation2 + $0x30] sm:$0xff]
          %v951 = vld [vmem:[#allocation2 + $0x38] sm:$0xff]
          %v952 = vld [vmem:[%s3] sm:$0xf]
          %v954 = vlaneseq
          %v955 = vshrl.u32 %v954, 7
          %v956 = vsub.s32 0, %v955
          %v957 = vrot.slane %v952, %v956
          %v958 = vlaneseq
          %v959 = vshrl.u32 %v958, 7
          %v960 = vsub.s32 1, %v959
          %v961 = vrot.slane %v952, %v960
          %v962 = vlaneseq
          %v963 = vshrl.u32 %v962, 7
          %v964 = vsub.s32 2, %v963
          %v965 = vrot.slane %v952, %v964
          %v966 = vlaneseq
          %v967 = vshrl.u32 %v966, 7
          %v968 = vsub.s32 3, %v967
          %v969 = vrot.slane %v952, %v968
          %v974 = vadd.f32 %v944, %v957
          %v975 = vadd.f32 %v945, %v961
          %v976 = vadd.f32 %v946, %v965
          %v977 = vadd.f32 %v947, %v969
          %v978 = vadd.f32 %v948, %v957
          %v979 = vadd.f32 %v949, %v961
          %v980 = vadd.f32 %v950, %v965
          %v981 = vadd.f32 %v951, %v969
          %v982 = vmax.f32 %v974, 0.0
          %v983 = vmax.f32 %v975, 0.0
          %v984 = vmax.f32 %v976, 0.0
          %v985 = vmax.f32 %v977, 0.0
          %v986 = vmax.f32 %v978, 0.0
          %v987 = vmax.f32 %v979, 0.0
          %v988 = vmax.f32 %v980, 0.0
          %v989 = vmax.f32 %v981, 0.0
          %v990 = vpack.c.bf16 %v986, %v982
          %v991 = vpack.c.bf16 %v987, %v983
          %v992 = vpack.c.bf16 %v988, %v984
          %v993 = vpack.c.bf16 %v989, %v985
          %v994 = vld [vmem:[#allocation10] sm:$0xf]
          %v995 = vld [vmem:[#allocation10 + $0x4] sm:$0xf]
          %v996 = vld [vmem:[#allocation10 + $0x8] sm:$0xf]
          %v997 = vld [vmem:[#allocation10 + $0xc] sm:$0xf]
          %v998 = vld [vmem:[#allocation10 + $0x10] sm:$0xf]
          %v999 = vld [vmem:[#allocation10 + $0x14] sm:$0xf]
          %v1000 = vld [vmem:[#allocation10 + $0x18] sm:$0xf]
          %v1001 = vld [vmem:[#allocation10 + $0x1c] sm:$0xf]
          %v1002 = vld [vmem:[#allocation10 + $0x20] sm:$0xf]
          %v1003 = vld [vmem:[#allocation10 + $0x24] sm:$0xf]
          %v1004 = vld [vmem:[#allocation10 + $0x28] sm:$0xf]
          %v1005 = vld [vmem:[#allocation10 + $0x2c] sm:$0xf]
          %v1006 = vld [vmem:[#allocation10 + $0x30] sm:$0xf]
          %v1007 = vld [vmem:[#allocation10 + $0x34] sm:$0xf]
          %v1008 = vld [vmem:[#allocation10 + $0x38] sm:$0xf]
          %v1009 = vld [vmem:[#allocation10 + $0x3c] sm:$0xf]
          %v1010 = vld [vmem:[#allocation10 + $0x40] sm:$0xf]
          %v1011 = vld [vmem:[#allocation10 + $0x44] sm:$0xf]
          %v1012 = vld [vmem:[#allocation10 + $0x48] sm:$0xf]
          %v1013 = vld [vmem:[#allocation10 + $0x4c] sm:$0xf]
          %v1014 = vld [vmem:[#allocation10 + $0x50] sm:$0xf]
          %v1015 = vld [vmem:[#allocation10 + $0x54] sm:$0xf]
          %v1016 = vld [vmem:[#allocation10 + $0x58] sm:$0xf]
          %v1017 = vld [vmem:[#allocation10 + $0x5c] sm:$0xf]
          %v1018 = vld [vmem:[#allocation10 + $0x60] sm:$0xf]
          %v1019 = vld [vmem:[#allocation10 + $0x64] sm:$0xf]
          %v1020 = vld [vmem:[#allocation10 + $0x68] sm:$0xf]
          %v1021 = vld [vmem:[#allocation10 + $0x6c] sm:$0xf]
          %v1022 = vld [vmem:[#allocation10 + $0x70] sm:$0xf]
          %v1023 = vld [vmem:[#allocation10 + $0x74] sm:$0xf]
          %v1024 = vld [vmem:[#allocation10 + $0x78] sm:$0xf]
          %v1025 = vld [vmem:[#allocation10 + $0x7c] sm:$0xf]
          %v1026 = vld [vmem:[#allocation10 + $0x80] sm:$0xf]
          %v1027 = vld [vmem:[#allocation10 + $0x84] sm:$0xf]
          %v1028 = vld [vmem:[#allocation10 + $0x88] sm:$0xf]
          %v1029 = vld [vmem:[#allocation10 + $0x8c] sm:$0xf]
          %v1030 = vld [vmem:[#allocation10 + $0x90] sm:$0xf]
          %v1031 = vld [vmem:[#allocation10 + $0x94] sm:$0xf]
          %v1032 = vld [vmem:[#allocation10 + $0x98] sm:$0xf]
          %v1033 = vld [vmem:[#allocation10 + $0x9c] sm:$0xf]
          %v1034 = vld [vmem:[#allocation10 + $0xa0] sm:$0xf]
          %v1035 = vld [vmem:[#allocation10 + $0xa4] sm:$0xf]
          %v1036 = vld [vmem:[#allocation10 + $0xa8] sm:$0xf]
          %v1037 = vld [vmem:[#allocation10 + $0xac] sm:$0xf]
          %v1038 = vld [vmem:[#allocation10 + $0xb0] sm:$0xf]
          %v1039 = vld [vmem:[#allocation10 + $0xb4] sm:$0xf]
          %v1040 = vld [vmem:[#allocation10 + $0xb8] sm:$0xf]
          %v1041 = vld [vmem:[#allocation10 + $0xbc] sm:$0xf]
          %v1042 = vld [vmem:[#allocation10 + $0xc0] sm:$0xf]
          %v1043 = vld [vmem:[#allocation10 + $0xc4] sm:$0xf]
          %v1044 = vld [vmem:[#allocation10 + $0xc8] sm:$0xf]
          %v1045 = vld [vmem:[#allocation10 + $0xcc] sm:$0xf]
          %v1046 = vld [vmem:[#allocation10 + $0xd0] sm:$0xf]
          %v1047 = vld [vmem:[#allocation10 + $0xd4] sm:$0xf]
          %v1048 = vld [vmem:[#allocation10 + $0xd8] sm:$0xf]
          %v1049 = vld [vmem:[#allocation10 + $0xdc] sm:$0xf]
          %v1050 = vld [vmem:[#allocation10 + $0xe0] sm:$0xf]
          %v1051 = vld [vmem:[#allocation10 + $0xe4] sm:$0xf]
          %v1052 = vld [vmem:[#allocation10 + $0xe8] sm:$0xf]
          %v1053 = vld [vmem:[#allocation10 + $0xec] sm:$0xf]
          %v1054 = vld [vmem:[#allocation10 + $0xf0] sm:$0xf]
          %v1055 = vld [vmem:[#allocation10 + $0xf4] sm:$0xf]
          %v1056 = vld [vmem:[#allocation10 + $0xf8] sm:$0xf]
          %v1057 = vld [vmem:[#allocation10 + $0xfc] sm:$0xf]
          %v1058 = vld [vmem:[%s5] sm:$0x1]
          %v1060 = vlaneseq
          %v1061 = vshrl.u32 %v1060, 7
          %v1062 = vsub.s32 0, %v1061
          %v1063 = vrot.slane %v1058, %v1062
          %v1129 = vunpack.c.l.b16 %v994
          %v1130 = vunpack.c.l.b16 %v995
          %v1131 = vunpack.c.l.b16 %v996
          %v1132 = vunpack.c.l.b16 %v997
          %v1133 = vunpack.c.l.b16 %v998
          %v1134 = vunpack.c.l.b16 %v999
          %v1135 = vunpack.c.l.b16 %v1000
          %v1136 = vunpack.c.l.b16 %v1001
          %v1137 = vunpack.c.l.b16 %v1002
          %v1138 = vunpack.c.l.b16 %v1003
          %v1139 = vunpack.c.l.b16 %v1004
          %v1140 = vunpack.c.l.b16 %v1005
          %v1141 = vunpack.c.l.b16 %v1006
          %v1142 = vunpack.c.l.b16 %v1007
          %v1143 = vunpack.c.l.b16 %v1008
          %v1144 = vunpack.c.l.b16 %v1009
          %v1145 = vunpack.c.l.b16 %v1010
          %v1146 = vunpack.c.l.b16 %v1011
          %v1147 = vunpack.c.l.b16 %v1012
          %v1148 = vunpack.c.l.b16 %v1013
          %v1149 = vunpack.c.l.b16 %v1014
          %v1150 = vunpack.c.l.b16 %v1015
          %v1151 = vunpack.c.l.b16 %v1016
          %v1152 = vunpack.c.l.b16 %v1017
          %v1153 = vunpack.c.l.b16 %v1018
          %v1154 = vunpack.c.l.b16 %v1019
          %v1155 = vunpack.c.l.b16 %v1020
          %v1156 = vunpack.c.l.b16 %v1021
          %v1157 = vunpack.c.l.b16 %v1022
          %v1158 = vunpack.c.l.b16 %v1023
          %v1159 = vunpack.c.l.b16 %v1024
          %v1160 = vunpack.c.l.b16 %v1025
          %v1161 = vunpack.c.l.b16 %v1026
          %v1162 = vunpack.c.l.b16 %v1027
          %v1163 = vunpack.c.l.b16 %v1028
          %v1164 = vunpack.c.l.b16 %v1029
          %v1165 = vunpack.c.l.b16 %v1030
          %v1166 = vunpack.c.l.b16 %v1031
          %v1167 = vunpack.c.l.b16 %v1032
          %v1168 = vunpack.c.l.b16 %v1033
          %v1169 = vunpack.c.l.b16 %v1034
          %v1170 = vunpack.c.l.b16 %v1035
          %v1171 = vunpack.c.l.b16 %v1036
          %v1172 = vunpack.c.l.b16 %v1037
          %v1173 = vunpack.c.l.b16 %v1038
          %v1174 = vunpack.c.l.b16 %v1039
          %v1175 = vunpack.c.l.b16 %v1040
          %v1176 = vunpack.c.l.b16 %v1041
          %v1177 = vunpack.c.l.b16 %v1042
          %v1178 = vunpack.c.l.b16 %v1043
          %v1179 = vunpack.c.l.b16 %v1044
          %v1180 = vunpack.c.l.b16 %v1045
          %v1181 = vunpack.c.l.b16 %v1046
          %v1182 = vunpack.c.l.b16 %v1047
          %v1183 = vunpack.c.l.b16 %v1048
          %v1184 = vunpack.c.l.b16 %v1049
          %v1185 = vunpack.c.l.b16 %v1050
          %v1186 = vunpack.c.l.b16 %v1051
          %v1187 = vunpack.c.l.b16 %v1052
          %v1188 = vunpack.c.l.b16 %v1053
          %v1189 = vunpack.c.l.b16 %v1054
          %v1190 = vunpack.c.l.b16 %v1055
          %v1191 = vunpack.c.l.b16 %v1056
          %v1192 = vunpack.c.l.b16 %v1057
          %v1193 = vpack.c.b16 %v1130, %v1129
          %v1194 = vpack.c.b16 %v1132, %v1131
          %v1195 = vpack.c.b16 %v1134, %v1133
          %v1196 = vpack.c.b16 %v1136, %v1135
          %v1197 = vpack.c.b16 %v1138, %v1137
          %v1198 = vpack.c.b16 %v1140, %v1139
          %v1199 = vpack.c.b16 %v1142, %v1141
          %v1200 = vpack.c.b16 %v1144, %v1143
          %v1201 = vpack.c.b16 %v1146, %v1145
          %v1202 = vpack.c.b16 %v1148, %v1147
          %v1203 = vpack.c.b16 %v1150, %v1149
          %v1204 = vpack.c.b16 %v1152, %v1151
          %v1205 = vpack.c.b16 %v1154, %v1153
          %v1206 = vpack.c.b16 %v1156, %v1155
          %v1207 = vpack.c.b16 %v1158, %v1157
          %v1208 = vpack.c.b16 %v1160, %v1159
          %v1209 = vpack.c.b16 %v1162, %v1161
          %v1210 = vpack.c.b16 %v1164, %v1163
          %v1211 = vpack.c.b16 %v1166, %v1165
          %v1212 = vpack.c.b16 %v1168, %v1167
          %v1213 = vpack.c.b16 %v1170, %v1169
          %v1214 = vpack.c.b16 %v1172, %v1171
          %v1215 = vpack.c.b16 %v1174, %v1173
          %v1216 = vpack.c.b16 %v1176, %v1175
          %v1217 = vpack.c.b16 %v1178, %v1177
          %v1218 = vpack.c.b16 %v1180, %v1179
          %v1219 = vpack.c.b16 %v1182, %v1181
          %v1220 = vpack.c.b16 %v1184, %v1183
          %v1221 = vpack.c.b16 %v1186, %v1185
          %v1222 = vpack.c.b16 %v1188, %v1187
          %v1223 = vpack.c.b16 %v1190, %v1189
          %v1224 = vpack.c.b16 %v1192, %v1191
          %1257 = vmatprep.subr.bf16.mxu0 0
          %1258 = vmatpush1.bf16.msra.mxu0 %v1193
          %1259 = vmatprep.subr.bf16.mxu0 0
          %1260 = vmatpush1.bf16.msra.mxu0 %v1194
          %1261 = vmatprep.subr.bf16.mxu0 0
          %1262 = vmatpush1.bf16.msra.mxu0 %v1195
          %1263 = vmatprep.subr.bf16.mxu0 0
          %1264 = vmatpush1.bf16.msra.mxu0 %v1196
          %1265 = vmatprep.subr.bf16.mxu0 0
          %1266 = vmatpush1.bf16.msra.mxu0 %v1197
          %1267 = vmatprep.subr.bf16.mxu0 0
          %1268 = vmatpush1.bf16.msra.mxu0 %v1198
          %1269 = vmatprep.subr.bf16.mxu0 0
          %1270 = vmatpush1.bf16.msra.mxu0 %v1199
          %1271 = vmatprep.subr.bf16.mxu0 0
          %1272 = vmatpush1.bf16.msra.mxu0 %v1200
          %1273 = vmatprep.subr.bf16.mxu0 0
          %1274 = vmatpush1.bf16.msra.mxu0 %v1201
          %1275 = vmatprep.subr.bf16.mxu0 0
          %1276 = vmatpush1.bf16.msra.mxu0 %v1202
          %1277 = vmatprep.subr.bf16.mxu0 0
          %1278 = vmatpush1.bf16.msra.mxu0 %v1203
          %1279 = vmatprep.subr.bf16.mxu0 0
          %1280 = vmatpush1.bf16.msra.mxu0 %v1204
          %1281 = vmatprep.subr.bf16.mxu0 0
          %1282 = vmatpush1.bf16.msra.mxu0 %v1205
          %1283 = vmatprep.subr.bf16.mxu0 0
          %1284 = vmatpush1.bf16.msra.mxu0 %v1206
          %1285 = vmatprep.subr.bf16.mxu0 0
          %1286 = vmatpush1.bf16.msra.mxu0 %v1207
          %1287 = vmatprep.subr.bf16.mxu0 0
          %1288 = vmatpush1.bf16.msra.mxu0 %v1208
          %1289 = vmatprep.mubr.bf16.mxu0 %v991
          %1290 = vmatmul.mubr.bf16.gmra.mrb[0].mxu0 %v990
          %v1291 = vpop.f32.mrb[0].mxu0
          %v1292 = vadd.f32 %v1063, %v1291
          %v1293 = vpop.f32.mrb[0].mxu0
          %v1294 = vpop.f32.mrb[0].mxu0
          %v1295 = vadd.f32 %v1063, %v1294
          %v1296 = vpop.f32.mrb[0].mxu0
          %1297 = vdwg.mxu0
          %1298 = vmatprep.subr.bf16.mxu0 0
          %1299 = vmatpush1.bf16.msra.mxu0 %v1209
          %1300 = vmatprep.subr.bf16.mxu0 0
          %1301 = vmatpush1.bf16.msra.mxu0 %v1210
          %1302 = vmatprep.subr.bf16.mxu0 0
          %1303 = vmatpush1.bf16.msra.mxu0 %v1211
          %1304 = vmatprep.subr.bf16.mxu0 0
          %1305 = vmatpush1.bf16.msra.mxu0 %v1212
          %1306 = vmatprep.subr.bf16.mxu0 0
          %1307 = vmatpush1.bf16.msra.mxu0 %v1213
          %1308 = vmatprep.subr.bf16.mxu0 0
          %1309 = vmatpush1.bf16.msra.mxu0 %v1214
          %1310 = vmatprep.subr.bf16.mxu0 0
          %1311 = vmatpush1.bf16.msra.mxu0 %v1215
          %1312 = vmatprep.subr.bf16.mxu0 0
          %1313 = vmatpush1.bf16.msra.mxu0 %v1216
          %1314 = vmatprep.subr.bf16.mxu0 0
          %1315 = vmatpush1.bf16.msra.mxu0 %v1217
          %1316 = vmatprep.subr.bf16.mxu0 0
          %1317 = vmatpush1.bf16.msra.mxu0 %v1218
          %1318 = vmatprep.subr.bf16.mxu0 0
          %1319 = vmatpush1.bf16.msra.mxu0 %v1219
          %1320 = vmatprep.subr.bf16.mxu0 0
          %1321 = vmatpush1.bf16.msra.mxu0 %v1220
          %1322 = vmatprep.subr.bf16.mxu0 0
          %1323 = vmatpush1.bf16.msra.mxu0 %v1221
          %1324 = vmatprep.subr.bf16.mxu0 0
          %1325 = vmatpush1.bf16.msra.mxu0 %v1222
          %1326 = vmatprep.subr.bf16.mxu0 0
          %1327 = vmatpush1.bf16.msra.mxu0 %v1223
          %1328 = vmatprep.subr.bf16.mxu0 0
          %1329 = vmatpush1.bf16.msra.mxu0 %v1224
          %1330 = vmatprep.mubr.bf16.mxu0 %v993
          %1331 = vmatmul.mubr.bf16.gmra.mrb[0].mxu0 %v992
          %v1332 = vpop.f32.mrb[0].mxu0
          %v1333 = vadd.f32 %v1292, %v1332
          %v1334 = vpop.f32.mrb[0].mxu0
          %v1335 = vpop.f32.mrb[0].mxu0
          %v1336 = vadd.f32 %v1295, %v1335
          %v1337 = vpop.f32.mrb[0].mxu0
          %1338 = vdwg.mxu0
          %v1339 = vld [vmem:[#allocation7] sm:$0xff]
          %v1340 = vld [vmem:[#allocation7 + $0x8] sm:$0xff]
          %v1341 = vmul.f32 %v1333, 0.5
          %v1342 = vmul.f32 %v1336, 0.5
          %v1343 = vmul.f32 %v1341, 1.442695
          %v1344 = vpow.pop %v1343
          %v1345 = vmul.f32 %v1342, 1.442695
          %v1346 = vpow.pop %v1345
          %1349 = vrot.lane.b32.xlu0 %v1344, 96
          %v1350 = vpop.permute.xlu0 %1349
          %1351 = vrot.lane.b32.xlu0 %v1346, 96
          %v1352 = vpop.permute.xlu0 %1351
          %v1355 = vmul.f32 %v1339, %v1350
          %v1356 = vmul.f32 %v1340, %v1352
          %v1357 = vadd.f32 %v1333, %v1355
          %v1358 = vadd.f32 %v1336, %v1356
          %1359 = vst [vmem:[#allocation15] sm:$0xff] %v1333
          %1360 = vst [vmem:[#allocation15 + $0x8] sm:$0xff] %v1336
          %1363 = vrot.lane.b32.xlu0 %v1357, 64
          %v1364 = vpop.permute.xlu0 %1363
          %1365 = vrot.lane.b32.xlu0 %v1358, 64
          %v1366 = vpop.permute.xlu0 %1365
          %vm1369 = vcmask 785920
          %1370 = vst.msk [vmem:[#allocation15] sm:$0xff] %vm1369, %v1364
          %1371 = vst.msk [vmem:[#allocation15 + $0x8] sm:$0xff] %vm1369, %v1366
          %v1372 = vpack.c.bf16 %v1358, %v1357
          %v1373 = vld [vmem:[#allocation11] sm:$0xff]
          %v1374 = vld [vmem:[#allocation11 + $0x8] sm:$0xff]
          %v1375 = vld [vmem:[#allocation11 + $0x10] sm:$0xff]
          %v1376 = vld [vmem:[#allocation11 + $0x18] sm:$0xff]
          %v1377 = vld [vmem:[#allocation11 + $0x20] sm:$0xff]
          %v1378 = vld [vmem:[#allocation11 + $0x28] sm:$0xff]
          %v1379 = vld [vmem:[#allocation11 + $0x30] sm:$0xff]
          %v1380 = vld [vmem:[#allocation11 + $0x38] sm:$0xff]
          %v1381 = vld [vmem:[%s7] sm:$0xf]
          %v1383 = vlaneseq
          %v1384 = vshrl.u32 %v1383, 7
          %v1385 = vsub.s32 0, %v1384
          %v1386 = vrot.slane %v1381, %v1385
          %v1387 = vlaneseq
          %v1388 = vshrl.u32 %v1387, 7
          %v1389 = vsub.s32 1, %v1388
          %v1390 = vrot.slane %v1381, %v1389
          %v1391 = vlaneseq
          %v1392 = vshrl.u32 %v1391, 7
          %v1393 = vsub.s32 2, %v1392
          %v1394 = vrot.slane %v1381, %v1393
          %v1395 = vlaneseq
          %v1396 = vshrl.u32 %v1395, 7
          %v1397 = vsub.s32 3, %v1396
          %v1398 = vrot.slane %v1381, %v1397
          %v1411 = vunpack.c.l.b16 %v1373
          %v1412 = vunpack.c.h.b16 %v1373
          %v1413 = vunpack.c.l.b16 %v1374
          %v1414 = vunpack.c.h.b16 %v1374
          %v1415 = vunpack.c.l.b16 %v1375
          %v1416 = vunpack.c.h.b16 %v1375
          %v1417 = vunpack.c.l.b16 %v1376
          %v1418 = vunpack.c.h.b16 %v1376
          %v1419 = vunpack.c.l.b16 %v1377
          %v1420 = vunpack.c.h.b16 %v1377
          %v1421 = vunpack.c.l.b16 %v1378
          %v1422 = vunpack.c.h.b16 %v1378
          %v1423 = vunpack.c.l.b16 %v1379
          %v1424 = vunpack.c.h.b16 %v1379
          %v1425 = vunpack.c.l.b16 %v1380
          %v1426 = vunpack.c.h.b16 %v1380
          %v1427 = vpack.c.b16 %v1415, %v1411
          %v1428 = vpack.c.b16 %v1416, %v1412
          %v1429 = vpack.c.b16 %v1417, %v1413
          %v1430 = vpack.c.b16 %v1418, %v1414
          %v1431 = vpack.c.b16 %v1423, %v1419
          %v1432 = vpack.c.b16 %v1424, %v1420
          %v1433 = vpack.c.b16 %v1425, %v1421
          %v1434 = vpack.c.b16 %v1426, %v1422
          %vm1443 = vcmask 261120
          %v1445 = vsel %vm1443, %v1372, 0
          %1447 = vmatprep.subr.bf16.mxu0 %v1428
          %1448 = vmatpush1.bf16.msra.mxu0 %v1427
          %1449 = vmatprep.subr.bf16.mxu0 %v1432
          %1450 = vmatpush1.bf16.msra.mxu0 %v1431
          %1451 = vmatprep.subr.bf16.mxu0 0
          %1452 = vmatpush1.bf16.msra.mxu0 0
          %1453 = vmatprep.subr.bf16.mxu0 0
          %1454 = vmatpush1.bf16.msra.mxu0 0
          %1455 = vmatprep.subr.bf16.mxu0 0
          %1456 = vmatpush1.bf16.msra.mxu0 0
          %1457 = vmatprep.subr.bf16.mxu0 0
          %1458 = vmatpush1.bf16.msra.mxu0 0
          %1459 = vmatprep.subr.bf16.mxu0 0
          %1460 = vmatpush1.bf16.msra.mxu0 0
          %1461 = vmatprep.subr.bf16.mxu0 0
          %1462 = vmatpush1.bf16.msra.mxu0 0
          %1463 = vmatprep.subr.bf16.mxu0 0
          %1464 = vmatpush1.bf16.msra.mxu0 0
          %1465 = vmatprep.subr.bf16.mxu0 0
          %1466 = vmatpush1.bf16.msra.mxu0 0
          %1467 = vmatprep.subr.bf16.mxu0 0
          %1468 = vmatpush1.bf16.msra.mxu0 0
          %1469 = vmatprep.subr.bf16.mxu0 0
          %1470 = vmatpush1.bf16.msra.mxu0 0
          %1471 = vmatprep.subr.bf16.mxu0 0
          %1472 = vmatpush1.bf16.msra.mxu0 0
          %1473 = vmatprep.subr.bf16.mxu0 0
          %1474 = vmatpush1.bf16.msra.mxu0 0
          %1475 = vmatprep.subr.bf16.mxu0 0
          %1476 = vmatpush1.bf16.msra.mxu0 0
          %1477 = vmatprep.subr.bf16.mxu0 0
          %1478 = vmatpush1.bf16.msra.mxu0 0
          %1479 = vmatprep.mubr.bf16.mxu0 0
          %1480 = vmatmul.mubr.bf16.gmra.mrb[0].mxu0 %v1445
          %v1481 = vpop.f32.mrb[0].mxu0
          %v1482 = vadd.f32 %v1386, %v1481
          %v1483 = vpop.f32.mrb[0].mxu0
          %v1484 = vadd.f32 %v1390, %v1483
          %v1485 = vpop.f32.mrb[0].mxu0
          %v1486 = vadd.f32 %v1386, %v1485
          %v1487 = vpop.f32.mrb[0].mxu0
          %v1488 = vadd.f32 %v1390, %v1487
          %1489 = vdwg.mxu0
          %1490 = vmatprep.subr.bf16.mxu0 %v1430
          %1491 = vmatpush1.bf16.msra.mxu0 %v1429
          %1492 = vmatprep.subr.bf16.mxu0 %v1434
          %1493 = vmatpush1.bf16.msra.mxu0 %v1433
          %1494 = vmatprep.subr.bf16.mxu0 0
          %1495 = vmatpush1.bf16.msra.mxu0 0
          %1496 = vmatprep.subr.bf16.mxu0 0
          %1497 = vmatpush1.bf16.msra.mxu0 0
          %1498 = vmatprep.subr.bf16.mxu0 0
          %1499 = vmatpush1.bf16.msra.mxu0 0
          %1500 = vmatprep.subr.bf16.mxu0 0
          %1501 = vmatpush1.bf16.msra.mxu0 0
          %1502 = vmatprep.subr.bf16.mxu0 0
          %1503 = vmatpush1.bf16.msra.mxu0 0
          %1504 = vmatprep.subr.bf16.mxu0 0
          %1505 = vmatpush1.bf16.msra.mxu0 0
          %1506 = vmatprep.subr.bf16.mxu0 0
          %1507 = vmatpush1.bf16.msra.mxu0 0
          %1508 = vmatprep.subr.bf16.mxu0 0
          %1509 = vmatpush1.bf16.msra.mxu0 0
          %1510 = vmatprep.subr.bf16.mxu0 0
          %1511 = vmatpush1.bf16.msra.mxu0 0
          %1512 = vmatprep.subr.bf16.mxu0 0
          %1513 = vmatpush1.bf16.msra.mxu0 0
          %1514 = vmatprep.subr.bf16.mxu0 0
          %1515 = vmatpush1.bf16.msra.mxu0 0
          %1516 = vmatprep.subr.bf16.mxu0 0
          %1517 = vmatpush1.bf16.msra.mxu0 0
          %1518 = vmatprep.subr.bf16.mxu0 0
          %1519 = vmatpush1.bf16.msra.mxu0 0
          %1520 = vmatprep.subr.bf16.mxu0 0
          %1521 = vmatpush1.bf16.msra.mxu0 0
          %1522 = vmatprep.mubr.bf16.mxu0 0
          %1523 = vmatmul.mubr.bf16.gmra.mrb[0].mxu0 %v1445
          %v1524 = vpop.f32.mrb[0].mxu0
          %v1525 = vadd.f32 %v1394, %v1524
          %v1526 = vpop.f32.mrb[0].mxu0
          %v1527 = vadd.f32 %v1398, %v1526
          %v1528 = vpop.f32.mrb[0].mxu0
          %v1529 = vadd.f32 %v1394, %v1528
          %v1530 = vpop.f32.mrb[0].mxu0
          %v1531 = vadd.f32 %v1398, %v1530
          %1532 = vdwg.mxu0
          %v1533 = vmax.f32 %v1482, 0.0
          %v1534 = vmax.f32 %v1484, 0.0
          %v1535 = vmax.f32 %v1525, 0.0
          %v1536 = vmax.f32 %v1527, 0.0
          %v1537 = vmax.f32 %v1486, 0.0
          %v1538 = vmax.f32 %v1488, 0.0
          %v1539 = vmax.f32 %v1529, 0.0
          %v1540 = vmax.f32 %v1531, 0.0
          %v1541 = vpack.c.bf16 %v1537, %v1533
          %v1542 = vpack.c.bf16 %v1538, %v1534
          %v1543 = vpack.c.bf16 %v1539, %v1535
          %v1544 = vpack.c.bf16 %v1540, %v1536
          %1545 = vst [vmem:[#allocation3] sm:$0xff] %v1541
          %1546 = vst [vmem:[#allocation3 + $0x8] sm:$0xff] %v1542
          %1547 = vst [vmem:[#allocation3 + $0x10] sm:$0xff] %v1543
          %1548 = vst [vmem:[#allocation3 + $0x18] sm:$0xff] %v1544
        $region96: #{tpu_custom_call.1} parent=59 // pred_fallthru
          _
        %p1549 = scmp.eq.s32.totalorder %s38, 1
        // Predicated region
        $region97: #{tpu_custom_call.1} parent=59 // pred_check
          %p1550 = pneg %p1549
        $region98: #{tpu_custom_call.1} parent=59 // pred_check_branch
          %1552 = sbr.rel (%p1550) target = $region100
        $region99: #{tpu_custom_call.1} parent=59 // pred_region
          %v1553 = vld [vmem:[#allocation3] sm:$0xff]
          %v1554 = vld [vmem:[#allocation3 + $0x8] sm:$0xff]
          %v1555 = vld [vmem:[#allocation3 + $0x10] sm:$0xff]
          %v1556 = vld [vmem:[#allocation3 + $0x18] sm:$0xff]
          %v1557 = vld [vmem:[%s546] sm:$0xf]
          %v1558 = vld [vmem:[%s546 + $0x4] sm:$0xf]
          %v1559 = vld [vmem:[%s546 + $0x8] sm:$0xf]
          %v1560 = vld [vmem:[%s546 + $0xc] sm:$0xf]
          %v1561 = vld [vmem:[%s546 + $0x10] sm:$0xf]
          %v1562 = vld [vmem:[%s546 + $0x14] sm:$0xf]
          %v1563 = vld [vmem:[%s546 + $0x18] sm:$0xf]
          %v1564 = vld [vmem:[%s546 + $0x1c] sm:$0xf]
          %v1565 = vld [vmem:[%s546 + $0x20] sm:$0xf]
          %v1566 = vld [vmem:[%s546 + $0x24] sm:$0xf]
          %v1567 = vld [vmem:[%s546 + $0x28] sm:$0xf]
          %v1568 = vld [vmem:[%s546 + $0x2c] sm:$0xf]
          %v1569 = vld [vmem:[%s546 + $0x30] sm:$0xf]
          %v1570 = vld [vmem:[%s546 + $0x34] sm:$0xf]
          %v1571 = vld [vmem:[%s546 + $0x38] sm:$0xf]
          %v1572 = vld [vmem:[%s546 + $0x3c] sm:$0xf]
          %v1573 = vld [vmem:[%s546 + $0x40] sm:$0xf]
          %v1574 = vld [vmem:[%s546 + $0x44] sm:$0xf]
          %v1575 = vld [vmem:[%s546 + $0x48] sm:$0xf]
          %v1576 = vld [vmem:[%s546 + $0x4c] sm:$0xf]
          %v1577 = vld [vmem:[%s546 + $0x50] sm:$0xf]
          %v1578 = vld [vmem:[%s546 + $0x54] sm:$0xf]
          %v1579 = vld [vmem:[%s546 + $0x58] sm:$0xf]
          %v1580 = vld [vmem:[%s546 + $0x5c] sm:$0xf]
          %v1581 = vld [vmem:[%s546 + $0x60] sm:$0xf]
          %v1582 = vld [vmem:[%s546 + $0x64] sm:$0xf]
          %v1583 = vld [vmem:[%s546 + $0x68] sm:$0xf]
          %v1584 = vld [vmem:[%s546 + $0x6c] sm:$0xf]
          %v1585 = vld [vmem:[%s546 + $0x70] sm:$0xf]
          %v1586 = vld [vmem:[%s546 + $0x74] sm:$0xf]
          %v1587 = vld [vmem:[%s546 + $0x78] sm:$0xf]
          %v1588 = vld [vmem:[%s546 + $0x7c] sm:$0xf]
          %v1589 = vld [vmem:[%s546 + $0x80] sm:$0xf]
          %v1590 = vld [vmem:[%s546 + $0x84] sm:$0xf]
          %v1591 = vld [vmem:[%s546 + $0x88] sm:$0xf]
          %v1592 = vld [vmem:[%s546 + $0x8c] sm:$0xf]
          %v1593 = vld [vmem:[%s546 + $0x90] sm:$0xf]
          %v1594 = vld [vmem:[%s546 + $0x94] sm:$0xf]
          %v1595 = vld [vmem:[%s546 + $0x98] sm:$0xf]
          %v1596 = vld [vmem:[%s546 + $0x9c] sm:$0xf]
          %v1597 = vld [vmem:[%s546 + $0xa0] sm:$0xf]
          %v1598 = vld [vmem:[%s546 + $0xa4] sm:$0xf]
          %v1599 = vld [vmem:[%s546 + $0xa8] sm:$0xf]
          %v1600 = vld [vmem:[%s546 + $0xac] sm:$0xf]
          %v1601 = vld [vmem:[%s546 + $0xb0] sm:$0xf]
          %v1602 = vld [vmem:[%s546 + $0xb4] sm:$0xf]
          %v1603 = vld [vmem:[%s546 + $0xb8] sm:$0xf]
          %v1604 = vld [vmem:[%s546 + $0xbc] sm:$0xf]
          %v1605 = vld [vmem:[%s546 + $0xc0] sm:$0xf]
          %v1606 = vld [vmem:[%s546 + $0xc4] sm:$0xf]
          %v1607 = vld [vmem:[%s546 + $0xc8] sm:$0xf]
          %v1608 = vld [vmem:[%s546 + $0xcc] sm:$0xf]
          %v1609 = vld [vmem:[%s546 + $0xd0] sm:$0xf]
          %v1610 = vld [vmem:[%s546 + $0xd4] sm:$0xf]
          %v1611 = vld [vmem:[%s546 + $0xd8] sm:$0xf]
          %v1612 = vld [vmem:[%s546 + $0xdc] sm:$0xf]
          %v1613 = vld [vmem:[%s546 + $0xe0] sm:$0xf]
          %v1614 = vld [vmem:[%s546 + $0xe4] sm:$0xf]
          %v1615 = vld [vmem:[%s546 + $0xe8] sm:$0xf]
          %v1616 = vld [vmem:[%s546 + $0xec] sm:$0xf]
          %v1617 = vld [vmem:[%s546 + $0xf0] sm:$0xf]
          %v1618 = vld [vmem:[%s546 + $0xf4] sm:$0xf]
          %v1619 = vld [vmem:[%s546 + $0xf8] sm:$0xf]
          %v1620 = vld [vmem:[%s546 + $0xfc] sm:$0xf]
          %v1621 = vld [vmem:[%s612] sm:$0x1]
          %v1623 = vlaneseq
          %v1624 = vshrl.u32 %v1623, 7
          %v1625 = vsub.s32 0, %v1624
          %v1626 = vrot.slane %v1621, %v1625
          %v1692 = vunpack.c.l.b16 %v1557
          %v1693 = vunpack.c.l.b16 %v1558
          %v1694 = vunpack.c.l.b16 %v1559
          %v1695 = vunpack.c.l.b16 %v1560
          %v1696 = vunpack.c.l.b16 %v1561
          %v1697 = vunpack.c.l.b16 %v1562
          %v1698 = vunpack.c.l.b16 %v1563
          %v1699 = vunpack.c.l.b16 %v1564
          %v1700 = vunpack.c.l.b16 %v1565
          %v1701 = vunpack.c.l.b16 %v1566
          %v1702 = vunpack.c.l.b16 %v1567
          %v1703 = vunpack.c.l.b16 %v1568
          %v1704 = vunpack.c.l.b16 %v1569
          %v1705 = vunpack.c.l.b16 %v1570
          %v1706 = vunpack.c.l.b16 %v1571
          %v1707 = vunpack.c.l.b16 %v1572
          %v1708 = vunpack.c.l.b16 %v1573
          %v1709 = vunpack.c.l.b16 %v1574
          %v1710 = vunpack.c.l.b16 %v1575
          %v1711 = vunpack.c.l.b16 %v1576
          %v1712 = vunpack.c.l.b16 %v1577
          %v1713 = vunpack.c.l.b16 %v1578
          %v1714 = vunpack.c.l.b16 %v1579
          %v1715 = vunpack.c.l.b16 %v1580
          %v1716 = vunpack.c.l.b16 %v1581
          %v1717 = vunpack.c.l.b16 %v1582
          %v1718 = vunpack.c.l.b16 %v1583
          %v1719 = vunpack.c.l.b16 %v1584
          %v1720 = vunpack.c.l.b16 %v1585
          %v1721 = vunpack.c.l.b16 %v1586
          %v1722 = vunpack.c.l.b16 %v1587
          %v1723 = vunpack.c.l.b16 %v1588
          %v1724 = vunpack.c.l.b16 %v1589
          %v1725 = vunpack.c.l.b16 %v1590
          %v1726 = vunpack.c.l.b16 %v1591
          %v1727 = vunpack.c.l.b16 %v1592
          %v1728 = vunpack.c.l.b16 %v1593
          %v1729 = vunpack.c.l.b16 %v1594
          %v1730 = vunpack.c.l.b16 %v1595
          %v1731 = vunpack.c.l.b16 %v1596
          %v1732 = vunpack.c.l.b16 %v1597
          %v1733 = vunpack.c.l.b16 %v1598
          %v1734 = vunpack.c.l.b16 %v1599
          %v1735 = vunpack.c.l.b16 %v1600
          %v1736 = vunpack.c.l.b16 %v1601
          %v1737 = vunpack.c.l.b16 %v1602
          %v1738 = vunpack.c.l.b16 %v1603
          %v1739 = vunpack.c.l.b16 %v1604
          %v1740 = vunpack.c.l.b16 %v1605
          %v1741 = vunpack.c.l.b16 %v1606
          %v1742 = vunpack.c.l.b16 %v1607
          %v1743 = vunpack.c.l.b16 %v1608
          %v1744 = vunpack.c.l.b16 %v1609
          %v1745 = vunpack.c.l.b16 %v1610
          %v1746 = vunpack.c.l.b16 %v1611
          %v1747 = vunpack.c.l.b16 %v1612
          %v1748 = vunpack.c.l.b16 %v1613
          %v1749 = vunpack.c.l.b16 %v1614
          %v1750 = vunpack.c.l.b16 %v1615
          %v1751 = vunpack.c.l.b16 %v1616
          %v1752 = vunpack.c.l.b16 %v1617
          %v1753 = vunpack.c.l.b16 %v1618
          %v1754 = vunpack.c.l.b16 %v1619
          %v1755 = vunpack.c.l.b16 %v1620
          %v1756 = vpack.c.b16 %v1693, %v1692
          %v1757 = vpack.c.b16 %v1695, %v1694
          %v1758 = vpack.c.b16 %v1697, %v1696
          %v1759 = vpack.c.b16 %v1699, %v1698
          %v1760 = vpack.c.b16 %v1701, %v1700
          %v1761 = vpack.c.b16 %v1703, %v1702
          %v1762 = vpack.c.b16 %v1705, %v1704
          %v1763 = vpack.c.b16 %v1707, %v1706
          %v1764 = vpack.c.b16 %v1709, %v1708
          %v1765 = vpack.c.b16 %v1711, %v1710
          %v1766 = vpack.c.b16 %v1713, %v1712
          %v1767 = vpack.c.b16 %v1715, %v1714
          %v1768 = vpack.c.b16 %v1717, %v1716
          %v1769 = vpack.c.b16 %v1719, %v1718
          %v1770 = vpack.c.b16 %v1721, %v1720
          %v1771 = vpack.c.b16 %v1723, %v1722
          %v1772 = vpack.c.b16 %v1725, %v1724
          %v1773 = vpack.c.b16 %v1727, %v1726
          %v1774 = vpack.c.b16 %v1729, %v1728
          %v1775 = vpack.c.b16 %v1731, %v1730
          %v1776 = vpack.c.b16 %v1733, %v1732
          %v1777 = vpack.c.b16 %v1735, %v1734
          %v1778 = vpack.c.b16 %v1737, %v1736
          %v1779 = vpack.c.b16 %v1739, %v1738
          %v1780 = vpack.c.b16 %v1741, %v1740
          %v1781 = vpack.c.b16 %v1743, %v1742
          %v1782 = vpack.c.b16 %v1745, %v1744
          %v1783 = vpack.c.b16 %v1747, %v1746
          %v1784 = vpack.c.b16 %v1749, %v1748
          %v1785 = vpack.c.b16 %v1751, %v1750
          %v1786 = vpack.c.b16 %v1753, %v1752
          %v1787 = vpack.c.b16 %v1755, %v1754
          %1820 = vmatprep.subr.bf16.mxu0 0
          %1821 = vmatpush1.bf16.msra.mxu0 %v1756
          %1822 = vmatprep.subr.bf16.mxu0 0
          %1823 = vmatpush1.bf16.msra.mxu0 %v1757
          %1824 = vmatprep.subr.bf16.mxu0 0
          %1825 = vmatpush1.bf16.msra.mxu0 %v1758
          %1826 = vmatprep.subr.bf16.mxu0 0
          %1827 = vmatpush1.bf16.msra.mxu0 %v1759
          %1828 = vmatprep.subr.bf16.mxu0 0
          %1829 = vmatpush1.bf16.msra.mxu0 %v1760
          %1830 = vmatprep.subr.bf16.mxu0 0
          %1831 = vmatpush1.bf16.msra.mxu0 %v1761
          %1832 = vmatprep.subr.bf16.mxu0 0
          %1833 = vmatpush1.bf16.msra.mxu0 %v1762
          %1834 = vmatprep.subr.bf16.mxu0 0
          %1835 = vmatpush1.bf16.msra.mxu0 %v1763
          %1836 = vmatprep.subr.bf16.mxu0 0
          %1837 = vmatpush1.bf16.msra.mxu0 %v1764
          %1838 = vmatprep.subr.bf16.mxu0 0
          %1839 = vmatpush1.bf16.msra.mxu0 %v1765
          %1840 = vmatprep.subr.bf16.mxu0 0
          %1841 = vmatpush1.bf16.msra.mxu0 %v1766
          %1842 = vmatprep.subr.bf16.mxu0 0
          %1843 = vmatpush1.bf16.msra.mxu0 %v1767
          %1844 = vmatprep.subr.bf16.mxu0 0
          %1845 = vmatpush1.bf16.msra.mxu0 %v1768
          %1846 = vmatprep.subr.bf16.mxu0 0
          %1847 = vmatpush1.bf16.msra.mxu0 %v1769
          %1848 = vmatprep.subr.bf16.mxu0 0
          %1849 = vmatpush1.bf16.msra.mxu0 %v1770
          %1850 = vmatprep.subr.bf16.mxu0 0
          %1851 = vmatpush1.bf16.msra.mxu0 %v1771
          %1852 = vmatprep.mubr.bf16.mxu0 %v1554
          %1853 = vmatmul.mubr.bf16.gmra.mrb[0].mxu0 %v1553
          %v1854 = vpop.f32.mrb[0].mxu0
          %v1855 = vadd.f32 %v1626, %v1854
          %v1856 = vpop.f32.mrb[0].mxu0
          %v1857 = vpop.f32.mrb[0].mxu0
          %v1858 = vadd.f32 %v1626, %v1857
          %v1859 = vpop.f32.mrb[0].mxu0
          %1860 = vdwg.mxu0
          %1861 = vmatprep.subr.bf16.mxu0 0
          %1862 = vmatpush1.bf16.msra.mxu0 %v1772
          %1863 = vmatprep.subr.bf16.mxu0 0
          %1864 = vmatpush1.bf16.msra.mxu0 %v1773
          %1865 = vmatprep.subr.bf16.mxu0 0
          %1866 = vmatpush1.bf16.msra.mxu0 %v1774
          %1867 = vmatprep.subr.bf16.mxu0 0
          %1868 = vmatpush1.bf16.msra.mxu0 %v1775
          %1869 = vmatprep.subr.bf16.mxu0 0
          %1870 = vmatpush1.bf16.msra.mxu0 %v1776
          %1871 = vmatprep.subr.bf16.mxu0 0
          %1872 = vmatpush1.bf16.msra.mxu0 %v1777
          %1873 = vmatprep.subr.bf16.mxu0 0
          %1874 = vmatpush1.bf16.msra.mxu0 %v1778
          %1875 = vmatprep.subr.bf16.mxu0 0
          %1876 = vmatpush1.bf16.msra.mxu0 %v1779
          %1877 = vmatprep.subr.bf16.mxu0 0
          %1878 = vmatpush1.bf16.msra.mxu0 %v1780
          %1879 = vmatprep.subr.bf16.mxu0 0
          %1880 = vmatpush1.bf16.msra.mxu0 %v1781
          %1881 = vmatprep.subr.bf16.mxu0 0
          %1882 = vmatpush1.bf16.msra.mxu0 %v1782
          %1883 = vmatprep.subr.bf16.mxu0 0
          %1884 = vmatpush1.bf16.msra.mxu0 %v1783
          %1885 = vmatprep.subr.bf16.mxu0 0
          %1886 = vmatpush1.bf16.msra.mxu0 %v1784
          %1887 = vmatprep.subr.bf16.mxu0 0
          %1888 = vmatpush1.bf16.msra.mxu0 %v1785
          %1889 = vmatprep.subr.bf16.mxu0 0
          %1890 = vmatpush1.bf16.msra.mxu0 %v1786
          %1891 = vmatprep.subr.bf16.mxu0 0
          %1892 = vmatpush1.bf16.msra.mxu0 %v1787
          %1893 = vmatprep.mubr.bf16.mxu0 %v1556
          %1894 = vmatmul.mubr.bf16.gmra.mrb[0].mxu0 %v1555
          %v1895 = vpop.f32.mrb[0].mxu0
          %v1896 = vadd.f32 %v1855, %v1895
          %v1897 = vpop.f32.mrb[0].mxu0
          %v1898 = vpop.f32.mrb[0].mxu0
          %v1899 = vadd.f32 %v1858, %v1898
          %v1900 = vpop.f32.mrb[0].mxu0
          %1901 = vdwg.mxu0
          %1902 = vst [vmem:[%s596] sm:$0xff] %v1896
          %1903 = vst [vmem:[%s596 + $0x8] sm:$0xff] %v1899
        $region100: #{tpu_custom_call.1} parent=59 // pred_fallthru
          _
        %s1904 = sand.u32 %s316, 1
        %s1905 = scalar_lea.sflag [#allocation6], %s1904
        %s1906 = sand.u32 %s316, 1
        %s1907 = smul.addr %s1906, 16
        %s1908 = scalar_lea.vmem [#allocation14], %s1907
        // Predicated region
        $region101: #{tpu_custom_call.1} parent=59 // pred_check
          %p1909 = pneg %p326
        $region102: #{tpu_custom_call.1} parent=59 // pred_check_branch
          %1911 = sbr.rel (%p1909) target = $region104
        $region103: #{tpu_custom_call.1} parent=59 // pred_region
          %s1912 = smul.u32 %s39, %s38
          %s1913 = smul.u32 2, %s37
          %s1915 = ssub.s32 256, 256
          %1916 = vsyncadd %s1905, %s1915
          %s1917 = smul.addr %s1913, 2
          %s1918 = sadd.s32 %s1912, %s1917
          %s1919 = smul.addr %s1918, 128
          %s1920 = scalar_lea.hbm %s10, %s1919
          %s1921 = sshll.u32 %s1908, 4
          %s1922 = int_to_ptr.vmem [resolvable:$true] %s1921
          %1927 = dma.vmem_to_hbm [thread:$0]  %s1922, 256, %s1920, %s1905, 128, 256, 8
        $region104: #{tpu_custom_call.1} parent=59 // pred_fallthru
          _
        // Predicated region
        $region105: #{tpu_custom_call.1} parent=59 // pred_check
          %p1928 = pneg %p352
        $region106: #{tpu_custom_call.1} parent=59 // pred_check_branch
          %1930 = sbr.rel (%p1928) target = $region108
        $region107: #{tpu_custom_call.1} parent=59 // pred_region
          %s1931 = smul.u32 2, %s37
          %s1933 = ssub.s32 256, 256
          %1934 = vsyncadd [#allocation16], %s1933
          %s1935 = smul.addr %s1931, 128
          %s1936 = scalar_lea.hbm %s11, %s1935
          %s1937 = sshll.u32 [#allocation15], 4
          %s1938 = int_to_ptr.vmem [resolvable:$true] %s1937
          %1943 = dma.vmem_to_hbm [thread:$0]  %s1938, 256, %s1936, [#allocation16], 128, 128, 8
        $region108: #{tpu_custom_call.1} parent=59 // pred_fallthru
          _
        // Predicated region
        $region109: #{tpu_custom_call.1} parent=59 // pred_check
          %p1944 = pneg %p352
        $region110: #{tpu_custom_call.1} parent=59 // pred_check_branch
          %1946 = sbr.rel (%p1944) target = $region112
        $region111: #{tpu_custom_call.1} parent=59 // pred_region
          %1947 = dma.done [#allocation16], 256
        $region112: #{tpu_custom_call.1} parent=59 // pred_fallthru
          _
      $region60: #{tpu_custom_call.1} parent=5 // pred_fallthru
        _
      %p1948 = scmp.le.s32.totalorder 2, %s27
      // Predicated region
      $region113: #{tpu_custom_call.1} parent=5 // pred_check
        %p1949 = pneg %p1948
      $region114: #{tpu_custom_call.1} parent=5 // pred_check_branch
        %1951 = sbr.rel (%p1949) target = $region116
      $region115: #{tpu_custom_call.1} parent=5 // pred_region
        %s1952 = ssub.s32 %s27, 2
        // Predicated region
        $region117: #{tpu_custom_call.1} parent=115 // pred_check
          %p1953 = pneg %p332
        $region118: #{tpu_custom_call.1} parent=115 // pred_check_branch
          %1955 = sbr.rel (%p1953) target = $region120
        $region119: #{tpu_custom_call.1} parent=115 // pred_region
          %s1956 = sand.u32 %s317, 1
          %s1957 = scalar_lea.sflag [#allocation6], %s1956
          %s1958 = sand.u32 %s317, 1
          %s1959 = smul.addr %s1958, 16
          %s1960 = scalar_lea.vmem [#allocation14], %s1959
          %1961 = dma.done %s1957, 256
        $region120: #{tpu_custom_call.1} parent=115 // pred_fallthru
          _
      $region116: #{tpu_custom_call.1} parent=5 // pred_fallthru
        _
    $region6: #{tpu_custom_call.1} parent=1 // loop_footer
      %s31 = sadd.s32 1, %s27
    $region7: #{tpu_custom_call.1} parent=1 // loop_footer_branch
      %26 = sbr.rel target = $region3
    $region8: #{tpu_custom_call.1} parent=1 // loop_exit
      _
    %1962 = vsyncpa [#allocation5], 1
    %s1963 = scalar_lea.sflag [#allocation5], 1
    %1964 = vsyncpa %s1963, 1
    %1965 = vsyncpa [#allocation8], 1
    %1966 = vsyncpa [#allocation12], 1
    %1967 = vsyncpa [#allocation6], 1
    %s1968 = scalar_lea.sflag [#allocation6], 1
    %1969 = vsyncpa %s1968, 1
    %1970 = vsyncpa [#allocation16], 1

</llo_original>
